<compile_context>
chip_gen: v7x
topology: tpu7x:2x2x1
jax: 0.10.0
libtpu: 0.0.40
codegen_flags: <defaults>
</compile_context>

<pallas_src>
import math

import jax
import jax.numpy as jnp
from jax.experimental import pallas as pl
from jax.experimental.pallas import tpu as pltpu


# ----------------------------- in-kernel helpers -----------------------------

def _sigmoid(v):
    # Numerically stable logistic (no exp overflow for large |v|).
    z = jnp.exp(-jnp.abs(v))
    return jnp.where(v >= 0, 1.0 / (1.0 + z), z / (1.0 + z))


def _silu(v):
    return v * _sigmoid(v)


# ------------------------- fused multi-head QCBlock kernel -------------------
# grid = (head,).  One grid step = one QCBlock head, end to end:
# projections, gathers, key_update / linear_update MLPs, BatchNorm gate,
# msg_layer (Linear + LayerNorm) + SiLU, scatter-add aggregation.
def qc_heads_kernel(
    x_ref,        # (N, Cin)  bf16
    ef_ref,       # (E, Cin)  bf16
    idx_ref,      # (E, 2)    int32  [:,0] = source j, [:,1] = target i
    pkv_ref,      # (Cin, 2o) bf16   [K_v2v | V_v2v]
    pq_ref,       # (Cin, o)  bf16   K_v2v (query projection, width o only)
    pe_ref,       # (Cin, 2o) bf16   [K_e2v | V_e2v]
    w_ref,        # (4, 2o, 2o) bf16 [ku1_w, ku2_w, lu1_w, lu2_w]
    b_ref,        # (4, 1, 2o)  f32  [ku1_b, ku2_b, lu1_b, lu2_b]
    bn_ref,       # (2, 1, 2o)  f32  [bn_gamma, bn_beta]
    mlw_ref,      # (2o, o)     bf16 msg_layer linear weight
    mlb_ref,      # (3, 1, o)   f32  [msg_layer bias, ln_gamma, ln_beta]
    out_ref,      # (N, o)      f32  head-h slab of the (head, N, o) output
):
    f32 = jnp.float32
    bf16 = jnp.bfloat16
    N = x_ref.shape[0]
    E = ef_ref.shape[0]
    o = out_ref.shape[-1]

    x = x_ref[...]
    ef = ef_ref[...]

    # One-hot gather/scatter matrices built in VMEM from the edge indices
    # (no O(E*N) HBM traffic), cast to bf16 for the MXU (0/1 are exact).
    node_iota = jax.lax.broadcasted_iota(jnp.int32, (E, N), 1)
    g_src = (node_iota == idx_ref[:, 0:1]).astype(bf16)          # (E, N)
    g_dst = (node_iota == idx_ref[:, 1:2]).astype(bf16)          # (E, N)

    # Node / edge projections (bf16 operands, f32 accumulate).
    kv_nodes = jnp.dot(x, pkv_ref[...], preferred_element_type=f32)   # (N,2o) [K|V]
    q_nodes = jnp.dot(x, pq_ref[...], preferred_element_type=f32)     # (N,o)  K
    kv_edges = jnp.dot(ef, pe_ref[...], preferred_element_type=f32)   # (E,2o) [Ke|Ve]

    # Gathers as one-hot matmuls (MXU).
    kv_j = jnp.dot(g_src, kv_nodes.astype(bf16), preferred_element_type=f32)  # (E,2o)
    q_i = jnp.dot(g_dst, q_nodes.astype(bf16), preferred_element_type=f32)    # (E,o)

    # MLP inputs: one lane concat each (no zero-padded split weights).
    key_in = jnp.concatenate([kv_j[:, :o], kv_edges[:, :o]], axis=1).astype(bf16)
    val_in = jnp.concatenate([kv_j[:, o:], kv_edges[:, o:]], axis=1).astype(bf16)

    # key_update(cat([k_j, K_E])): Linear -> SiLU -> Linear.
    h1 = _silu(jnp.dot(key_in, w_ref[0], preferred_element_type=f32) + b_ref[0])
    key = jnp.dot(h1.astype(bf16), w_ref[1], preferred_element_type=f32) + b_ref[1]

    # alpha = cat([q_i, q_i]) * key_update(...) / sqrt(2*o)
    q_cat = jnp.concatenate([q_i, q_i], axis=1)                    # (E, 2o)
    alpha = q_cat * key * (1.0 / math.sqrt(2.0 * o))               # (E, 2o)

    # linear_update(cat([v_j, V_E])): Linear -> SiLU -> Linear.
    h2 = _silu(jnp.dot(val_in, w_ref[2], preferred_element_type=f32) + b_ref[2])
    lin = jnp.dot(h2.astype(bf16), w_ref[3], preferred_element_type=f32) + b_ref[3]

    # BatchNorm1d(2o) over edges (training mode: batch stats, biased variance).
    mu = jnp.mean(alpha, axis=0, keepdims=True)
    var = jnp.mean((alpha - mu) ** 2, axis=0, keepdims=True)
    gate = _sigmoid((alpha - mu) * jax.lax.rsqrt(var + 1e-5) * bn_ref[0]
                    + bn_ref[1])
    gated = lin * gate                                             # (E, 2o)

    # msg_layer: Linear(2o -> o) + LayerNorm(o), then SiLU.
    m = jnp.dot(gated.astype(bf16), mlw_ref[...], preferred_element_type=f32)
    m = m + mlb_ref[0]
    lm = jnp.mean(m, axis=-1, keepdims=True)
    lv = jnp.mean((m - lm) ** 2, axis=-1, keepdims=True)
    msg = _silu((m - lm) * jax.lax.rsqrt(lv + 1e-5) * mlb_ref[1] + mlb_ref[2])

    # Scatter-add to target nodes (aggr='add'): contract over E on g_dst
    # directly -- transposed-LHS matmul, no XLU transpose, f32 accumulate.
    out_ref[...] = jax.lax.dot_general(
        g_dst, msg.astype(bf16), (((0,), (0,)), ((), ())),
        preferred_element_type=f32)


# -------------------------- output / combine kernel --------------------------
# linear_concate_v + BatchNorm1d(out) + SiLU + residual.  The head concat is
# presented as one (N, head*o) slab, so this is a single contraction.
def qc_out_kernel(x_ref, hv_ref, wc_ref, bc_ref, g_ref, b_ref, out_ref):
    f32 = jnp.float32
    y = jnp.dot(hv_ref[...], wc_ref[...], preferred_element_type=f32) + bc_ref[...]
    m = jnp.mean(y, axis=0, keepdims=True)
    v = jnp.mean((y - m) ** 2, axis=0, keepdims=True)
    y = (y - m) * jax.lax.rsqrt(v + 1e-5) * g_ref[...] + b_ref[...]
    # dropout p=0 -> identity
    out_ref[...] = x_ref[...] + _silu(y)


# --------------------------------- parameters --------------------------------

def _xavier(key, shape):
    bound = math.sqrt(6.0 / (shape[0] + shape[1]))
    return jax.random.uniform(key, shape, jnp.float32, -bound, bound)


def _linear(key, fan_in, fan_out):
    kw, kb = jax.random.split(key)
    bound = 1.0 / math.sqrt(fan_in)
    w = jax.random.uniform(kw, (fan_in, fan_out), jnp.float32, -bound, bound)
    b = jax.random.uniform(kb, (fan_out,), jnp.float32, -bound, bound)
    return w, b


def init_qcconv_params(key, in_size, out_size, head):
    o, to = out_size, 2 * out_size
    bf16 = jnp.bfloat16
    head_keys = jax.random.split(key, head + 1)

    pkv_l, pq_l, pe_l, w_l, b_l, bn_l, mlw_l, mlb_l = ([] for _ in range(8))
    for h in range(head):
        ks = jax.random.split(head_keys[h], 9)
        K_v2v = _xavier(ks[0], (in_size, o))
        K_e2v = _xavier(ks[1], (in_size, o))
        V_v2v = _xavier(ks[2], (in_size, o))
        V_e2v = _xavier(ks[3], (in_size, o))
        ku1_w, ku1_b = _linear(ks[4], to, to)
        ku2_w, ku2_b = _linear(ks[5], to, to)
        lu1_w, lu1_b = _linear(ks[6], to, to)
        lu2_w, lu2_b = _linear(ks[7], to, to)
        ml_w, ml_b = _linear(ks[8], to, o)

        pkv_l.append(jnp.concatenate([K_v2v, V_v2v], axis=1))      # (Cin, 2o)
        pq_l.append(K_v2v)                                         # (Cin, o)
        pe_l.append(jnp.concatenate([K_e2v, V_e2v], axis=1))       # (Cin, 2o)
        w_l.append(jnp.stack([ku1_w, ku2_w, lu1_w, lu2_w]))        # (4, 2o, 2o)
        b_l.append(jnp.stack([ku1_b.reshape(1, to), ku2_b.reshape(1, to),
                              lu1_b.reshape(1, to), lu2_b.reshape(1, to)]))
        bn_l.append(jnp.stack([jnp.ones((1, to), jnp.float32),
                               jnp.zeros((1, to), jnp.float32)]))
        mlw_l.append(ml_w)                                         # (2o, o)
        mlb_l.append(jnp.stack([ml_b.reshape(1, o),
                                jnp.ones((1, o), jnp.float32),
                                jnp.zeros((1, o), jnp.float32)]))

    wc, bc = _linear(head_keys[-1], o * head, o)
    return dict(
        out_size=o, head=head,
        # Matmul weights in bf16 (MXU-native on all gens); biases/BN/LN in f32.
        pkv=jnp.stack(pkv_l).astype(bf16),    # (head, Cin, 2o)
        pq=jnp.stack(pq_l).astype(bf16),      # (head, Cin, o)
        pe=jnp.stack(pe_l).astype(bf16),      # (head, Cin, 2o)
        w=jnp.stack(w_l).astype(bf16),        # (head, 4, 2o, 2o)
        b=jnp.stack(b_l),                     # (head, 4, 1, 2o) f32
        bn=jnp.stack(bn_l),                   # (head, 2, 1, 2o) f32
        mlw=jnp.stack(mlw_l).astype(bf16),    # (head, 2o, o)
        mlb=jnp.stack(mlb_l),                 # (head, 3, 1, o) f32
        wc=wc.astype(bf16),                   # (head*o, o)
        bc=bc.reshape(1, o),
        bn_v_g=jnp.ones((1, o), jnp.float32),
        bn_v_b=jnp.zeros((1, o), jnp.float32),
    )


# ------------------------------ cost / VMEM budget ----------------------------

def _heads_cost(N, E, Cin, o, head):
    to = 2 * o
    flops = head * (
        2 * N * Cin * (to + o)        # node projections
        + 2 * E * Cin * to            # edge projection
        + 2 * E * N * (to + o)        # one-hot gathers
        + 4 * 2 * E * to * to         # key/linear update MLPs
        + 2 * E * to * o              # msg_layer
        + 2 * E * N * o               # scatter-add
    )
    transcendentals = head * E * (4 * to + 2 * o)       # SiLU / sigmoid exps
    bytes_accessed = (
        (N + E) * Cin * 2 + E * 2 * 4
        + head * ((2 * Cin * to + Cin * o + 4 * to * to + to * o) * 2
                  + (4 * to + 2 * to + 3 * o) * 4)
        + head * N * o * 4
    )
    return pl.CostEstimate(flops=int(flops),
                           transcendentals=int(transcendentals),
                           bytes_accessed=int(bytes_accessed))


def _heads_vmem_limit(N, E, Cin, o):
    to = 2 * o
    one_hots = 2 * E * N * 2                       # two bf16 (E, N) one-hots
    acts = 10 * E * to * 4 + N * to * 4            # f32 intermediates
    weights = (2 * Cin * to + Cin * o + 4 * to * to + to * o) * 2 \
        + (4 * to + 2 * to + 3 * o) * 4
    io = (N + E) * Cin * 2 + E * 2 * 4 + N * o * 4
    est = 2 * (one_hots + acts + weights + io)     # 2x for double buffering
    # Clamp to v7x's 64 MiB physical VMEM; never below the 32 MiB default.
    return int(min(max(est, 32 * 1024 * 1024), 64 * 1024 * 1024))


# ---------------------------------- wrapper -----------------------------------

_VMEM = pl.BlockSpec(memory_space=pltpu.MemorySpace.VMEM)


def qcconv_forward(params, x, edge_index, edge_feature):
    N, Cin = x.shape
    o = params["out_size"]
    head = params["head"]
    to = 2 * o
    f32 = jnp.float32
    bf16 = jnp.bfloat16

    if min(edge_feature.shape) == 0 or edge_index.shape[1] == 0:
        # Empty-edge branch of QCBlock.forward: each head returns x @ V_v2v.
        v_v2v = params["pkv"][:, :, o:]                           # (head, Cin, o)
        hv = jnp.einsum("nc,hco->hno", x.astype(bf16), v_v2v,
                        preferred_element_type=f32)
    else:
        E = edge_index.shape[1]
        idx = edge_index.T.astype(jnp.int32)                      # (E, 2)

        hv = pl.pallas_call(
            qc_heads_kernel,
            out_shape=jax.ShapeDtypeStruct((head, N, o), f32),
            grid=(head,),
            in_specs=[
                # Shared data: same block every head -> stays VMEM-resident.
                pl.BlockSpec((N, Cin), lambda h: (0, 0)),
                pl.BlockSpec((E, Cin), lambda h: (0, 0)),
                pl.BlockSpec((E, 2), lambda h: (0, 0)),
                # Per-head packed weights, selected by the head grid index.
                pl.BlockSpec((None, Cin, to), lambda h: (h, 0, 0)),
                pl.BlockSpec((None, Cin, o), lambda h: (h, 0, 0)),
                pl.BlockSpec((None, Cin, to), lambda h: (h, 0, 0)),
                pl.BlockSpec((None, 4, to, to), lambda h: (h, 0, 0, 0)),
                pl.BlockSpec((None, 4, 1, to), lambda h: (h, 0, 0, 0)),
                pl.BlockSpec((None, 2, 1, to), lambda h: (h, 0, 0, 0)),
                pl.BlockSpec((None, to, o), lambda h: (h, 0, 0)),
                pl.BlockSpec((None, 3, 1, o), lambda h: (h, 0, 0, 0)),
            ],
            out_specs=pl.BlockSpec((None, N, o), lambda h: (h, 0, 0)),
            compiler_params=pltpu.CompilerParams(
                # Head axis is independent -> shards across the 2 TCs on v7x.
                dimension_semantics=("parallel",),
                vmem_limit_bytes=_heads_vmem_limit(N, E, Cin, o)),
            cost_estimate=_heads_cost(N, E, Cin, o, head),
        )(x.astype(bf16), edge_feature.astype(bf16), idx,
          params["pkv"], params["pq"], params["pe"], params["w"],
          params["b"], params["bn"], params["mlw"], params["mlb"])

    # torch.cat(hidden_v, dim=1): (head, N, o) -> (N, head*o), bf16 for the MXU.
    hv_flat = hv.transpose(1, 0, 2).reshape(N, head * o).astype(bf16)

    # linear_concate_v + BatchNorm1d + SiLU + residual, fused in one call.
    out = pl.pallas_call(
        qc_out_kernel,
        out_shape=jax.ShapeDtypeStruct((N, o), f32),
        in_specs=[_VMEM] * 6,
        out_specs=_VMEM,
        cost_estimate=pl.CostEstimate(
            flops=int(2 * N * head * o * o + 12 * N * o),
            transcendentals=int(N * o),
            bytes_accessed=int(N * Cin * 4 + N * head * o * 2
                               + head * o * o * 2 + 2 * N * o * 4)),
    )(x, hv_flat, params["wc"], params["bc"], params["bn_v_g"], params["bn_v_b"])
    return out


# ------------------------------------ main ------------------------------------

if __name__ == "__main__":
    in_size = out_size = 32   # residual x + out requires in_size == out_size
    head = 2
    N, E = 8, 16

    key = jax.random.PRNGKey(0)
    k_x, k_ef, k_src, k_dst, k_p = jax.random.split(key, 5)

    x = jax.random.normal(k_x, (N, in_size), jnp.float32)
    edge_feature = jax.random.normal(k_ef, (E, in_size), jnp.float32)
    src = jax.random.randint(k_src, (E,), 0, N, dtype=jnp.int32)
    dst = jax.random.randint(k_dst, (E,), 0, N, dtype=jnp.int32)
    edge_index = jnp.stack([src, dst])  # row 0 = source j, row 1 = target i

    params = init_qcconv_params(k_p, in_size, out_size, head)

    out = qcconv_forward(params, x, edge_index, edge_feature)
    out = jax.block_until_ready(out)
    assert out.shape == (N, out_size) and out.dtype == jnp.float32
    assert bool(jnp.all(jnp.isfinite(out)))

    print("KERNEL_OK")
</pallas_src>

<mosaic_0001>
module attributes {stable_mosaic.version = 11 : i64} {
  func.func @qc_heads_kernel(%arg0: i32, %arg1: memref<8x32xbf16, #tpu.memory_space<vmem>>, %arg2: memref<16x32xbf16, #tpu.memory_space<vmem>>, %arg3: memref<16x2xi32, #tpu.memory_space<vmem>>, %arg4: memref<1x32x64xbf16, #tpu.memory_space<vmem>>, %arg5: memref<1x32x32xbf16, #tpu.memory_space<vmem>>, %arg6: memref<1x32x64xbf16, #tpu.memory_space<vmem>>, %arg7: memref<1x4x64x64xbf16, #tpu.memory_space<vmem>>, %arg8: memref<1x4x1x64xf32, #tpu.memory_space<vmem>>, %arg9: memref<1x2x1x64xf32, #tpu.memory_space<vmem>>, %arg10: memref<1x64x32xbf16, #tpu.memory_space<vmem>>, %arg11: memref<1x3x1x32xf32, #tpu.memory_space<vmem>>, %arg12: memref<1x8x32xf32, #tpu.memory_space<vmem>>) attributes {dimension_semantics = [#tpu.dimension_semantics<parallel>], iteration_bounds = array<i64: 2>, scalar_prefetch = 0 : i64, scratch_operands = 0 : i64, tpu.core_type = #tpu.core_type<tc>, window_params = [{pipeline_mode = #tpu.pipeline_mode<synchronous>, transform_indices = @transform_0, window_bounds = array<i64: 8, 32>}, {pipeline_mode = #tpu.pipeline_mode<synchronous>, transform_indices = @transform_1, window_bounds = array<i64: 16, 32>}, {pipeline_mode = #tpu.pipeline_mode<synchronous>, transform_indices = @transform_2, window_bounds = array<i64: 16, 2>}, {transform_indices = @transform_3, window_bounds = array<i64: 1, 32, 64>}, {transform_indices = @transform_4, window_bounds = array<i64: 1, 32, 32>}, {transform_indices = @transform_5, window_bounds = array<i64: 1, 32, 64>}, {transform_indices = @transform_6, window_bounds = array<i64: 1, 4, 64, 64>}, {transform_indices = @transform_7, window_bounds = array<i64: 1, 4, 1, 64>}, {transform_indices = @transform_8, window_bounds = array<i64: 1, 2, 1, 64>}, {transform_indices = @transform_9, window_bounds = array<i64: 1, 64, 32>}, {transform_indices = @transform_10, window_bounds = array<i64: 1, 3, 1, 32>}, {transform_indices = @transform_11, window_bounds = array<i64: 1, 8, 32>}]} {
    %c0 = arith.constant 0 : index
    %c0_0 = arith.constant 0 : index
    %0 = vector.load %arg1[%c0, %c0_0] : memref<8x32xbf16, #tpu.memory_space<vmem>>, vector<8x32xbf16>
    %c0_1 = arith.constant 0 : index
    %c0_2 = arith.constant 0 : index
    %1 = vector.load %arg2[%c0_1, %c0_2] : memref<16x32xbf16, #tpu.memory_space<vmem>>, vector<16x32xbf16>
    %2 = tpu.iota {dimensions = array<i32: 1>} : vector<16x8xi32>
    %c0_3 = arith.constant 0 : index
    %c0_4 = arith.constant 0 : index
    %3 = vector.load %arg3[%c0_3, %c0_4] : memref<16x2xi32, #tpu.memory_space<vmem>>, vector<16x1xi32>
    %4 = vector.broadcast %3 : vector<16x1xi32> to vector<16x8xi32>
    %5 = arith.cmpi eq, %2, %4 : vector<16x8xi32>
    %6 = arith.extui %5 : vector<16x8xi1> to vector<16x8xi32>
    %7 = arith.sitofp %6 : vector<16x8xi32> to vector<16x8xf32>
    %8 = arith.truncf %7 : vector<16x8xf32> to vector<16x8xbf16>
    %c0_5 = arith.constant 0 : index
    %c1 = arith.constant 1 : index
    %9 = vector.load %arg3[%c0_5, %c1] : memref<16x2xi32, #tpu.memory_space<vmem>>, vector<16x1xi32>
    %10 = vector.broadcast %9 : vector<16x1xi32> to vector<16x8xi32>
    %11 = arith.cmpi eq, %2, %10 : vector<16x8xi32>
    %12 = arith.extui %11 : vector<16x8xi1> to vector<16x8xi32>
    %13 = arith.sitofp %12 : vector<16x8xi32> to vector<16x8xf32>
    %14 = arith.truncf %13 : vector<16x8xf32> to vector<16x8xbf16>
    %c0_6 = arith.constant 0 : index
    %c0_7 = arith.constant 0 : index
    %c0_8 = arith.constant 0 : index
    %15 = vector.load %arg4[%c0_6, %c0_7, %c0_8] : memref<1x32x64xbf16, #tpu.memory_space<vmem>>, vector<1x32x64xbf16>
    %16 = vector.shape_cast %15 : vector<1x32x64xbf16> to vector<32x64xbf16>
    %cst = arith.constant dense<0.000000e+00> : vector<8x64xf32>
    %17 = tpu.matmul %0, %16, %cst {dimension_numbers = #tpu.dot_dimension_numbers<[1], [0], [0], [1], [0, 0, 1, 1], [], []>} : vector<8x32xbf16>, vector<32x64xbf16>, vector<8x64xf32> -> vector<8x64xf32>
    %c0_9 = arith.constant 0 : index
    %c0_10 = arith.constant 0 : index
    %c0_11 = arith.constant 0 : index
    %18 = vector.load %arg5[%c0_9, %c0_10, %c0_11] : memref<1x32x32xbf16, #tpu.memory_space<vmem>>, vector<1x32x32xbf16>
    %19 = vector.shape_cast %18 : vector<1x32x32xbf16> to vector<32x32xbf16>
    %cst_12 = arith.constant dense<0.000000e+00> : vector<8x32xf32>
    %20 = tpu.matmul %0, %19, %cst_12 {dimension_numbers = #tpu.dot_dimension_numbers<[1], [0], [0], [1], [0, 0, 1, 1], [], []>} : vector<8x32xbf16>, vector<32x32xbf16>, vector<8x32xf32> -> vector<8x32xf32>
    %c0_13 = arith.constant 0 : index
    %c0_14 = arith.constant 0 : index
    %c0_15 = arith.constant 0 : index
    %21 = vector.load %arg6[%c0_13, %c0_14, %c0_15] : memref<1x32x64xbf16, #tpu.memory_space<vmem>>, vector<1x32x64xbf16>
    %22 = vector.shape_cast %21 : vector<1x32x64xbf16> to vector<32x64xbf16>
    %cst_16 = arith.constant dense<0.000000e+00> : vector<16x64xf32>
    %23 = tpu.matmul %1, %22, %cst_16 {dimension_numbers = #tpu.dot_dimension_numbers<[1], [0], [0], [1], [0, 0, 1, 1], [], []>} : vector<16x32xbf16>, vector<32x64xbf16>, vector<16x64xf32> -> vector<16x64xf32>
    %24 = arith.truncf %17 : vector<8x64xf32> to vector<8x64xbf16>
    %cst_17 = arith.constant dense<0.000000e+00> : vector<16x64xf32>
    %25 = tpu.matmul %8, %24, %cst_17 {dimension_numbers = #tpu.dot_dimension_numbers<[1], [0], [0], [1], [0, 0, 1, 1], [], []>} : vector<16x8xbf16>, vector<8x64xbf16>, vector<16x64xf32> -> vector<16x64xf32>
    %26 = arith.truncf %20 : vector<8x32xf32> to vector<8x32xbf16>
    %cst_18 = arith.constant dense<0.000000e+00> : vector<16x32xf32>
    %27 = tpu.matmul %14, %26, %cst_18 {dimension_numbers = #tpu.dot_dimension_numbers<[1], [0], [0], [1], [0, 0, 1, 1], [], []>} : vector<16x8xbf16>, vector<8x32xbf16>, vector<16x32xf32> -> vector<16x32xf32>
    %28 = vector.extract_strided_slice %25 {offsets = [0, 0], sizes = [16, 32], strides = [1, 1]} : vector<16x64xf32> to vector<16x32xf32>
    %29 = vector.extract_strided_slice %23 {offsets = [0, 0], sizes = [16, 32], strides = [1, 1]} : vector<16x64xf32> to vector<16x32xf32>
    %30 = tpu.concatenate %28, %29 in 1 : vector<16x32xf32>, vector<16x32xf32> -> vector<16x64xf32>
    %31 = arith.truncf %30 : vector<16x64xf32> to vector<16x64xbf16>
    %32 = vector.extract_strided_slice %25 {offsets = [0, 32], sizes = [16, 32], strides = [1, 1]} : vector<16x64xf32> to vector<16x32xf32>
    %33 = vector.extract_strided_slice %23 {offsets = [0, 32], sizes = [16, 32], strides = [1, 1]} : vector<16x64xf32> to vector<16x32xf32>
    %34 = tpu.concatenate %32, %33 in 1 : vector<16x32xf32>, vector<16x32xf32> -> vector<16x64xf32>
    %35 = arith.truncf %34 : vector<16x64xf32> to vector<16x64xbf16>
    %c0_19 = arith.constant 0 : index
    %c0_20 = arith.constant 0 : index
    %c0_21 = arith.constant 0 : index
    %c0_22 = arith.constant 0 : index
    %36 = vector.load %arg7[%c0_19, %c0_20, %c0_21, %c0_22] : memref<1x4x64x64xbf16, #tpu.memory_space<vmem>>, vector<1x1x64x64xbf16>
    %37 = vector.shape_cast %36 : vector<1x1x64x64xbf16> to vector<64x64xbf16>
    %cst_23 = arith.constant dense<0.000000e+00> : vector<16x64xf32>
    %38 = tpu.matmul %31, %37, %cst_23 {dimension_numbers = #tpu.dot_dimension_numbers<[1], [0], [0], [1], [0, 0, 1, 1], [], []>} : vector<16x64xbf16>, vector<64x64xbf16>, vector<16x64xf32> -> vector<16x64xf32>
    %c0_24 = arith.constant 0 : index
    %c0_25 = arith.constant 0 : index
    %c0_26 = arith.constant 0 : index
    %c0_27 = arith.constant 0 : index
    %39 = vector.load %arg8[%c0_24, %c0_25, %c0_26, %c0_27] : memref<1x4x1x64xf32, #tpu.memory_space<vmem>>, vector<1x1x1x64xf32>
    %40 = vector.shape_cast %39 : vector<1x1x1x64xf32> to vector<1x64xf32>
    %41 = vector.broadcast %40 : vector<1x64xf32> to vector<16x64xf32>
    %42 = arith.addf %38, %41 : vector<16x64xf32>
    %43 = math.absf %42 : vector<16x64xf32>
    %cst_28 = arith.constant 0.000000e+00 : f32
    %44 = vector.broadcast %cst_28 : f32 to vector<16x64xf32>
    %45 = arith.subf %44, %43 : vector<16x64xf32>
    %46 = math.exp %45 : vector<16x64xf32>
    %cst_29 = arith.constant 0.000000e+00 : f32
    %47 = vector.broadcast %cst_29 : f32 to vector<16x64xf32>
    %48 = arith.cmpf oge, %42, %47 : vector<16x64xf32>
    %cst_30 = arith.constant 1.000000e+00 : f32
    %49 = vector.broadcast %cst_30 : f32 to vector<16x64xf32>
    %50 = arith.addf %49, %46 : vector<16x64xf32>
    %cst_31 = arith.constant 1.000000e+00 : f32
    %51 = vector.broadcast %cst_31 : f32 to vector<16x64xf32>
    %52 = arith.divf %51, %50 : vector<16x64xf32>
    %cst_32 = arith.constant 1.000000e+00 : f32
    %53 = vector.broadcast %cst_32 : f32 to vector<16x64xf32>
    %54 = arith.addf %53, %46 : vector<16x64xf32>
    %55 = arith.divf %46, %54 : vector<16x64xf32>
    %56 = arith.select %48, %52, %55 : vector<16x64xi1>, vector<16x64xf32>
    %57 = arith.mulf %42, %56 : vector<16x64xf32>
    %58 = arith.truncf %57 : vector<16x64xf32> to vector<16x64xbf16>
    %c0_33 = arith.constant 0 : index
    %c1_34 = arith.constant 1 : index
    %c0_35 = arith.constant 0 : index
    %c0_36 = arith.constant 0 : index
    %59 = vector.load %arg7[%c0_33, %c1_34, %c0_35, %c0_36] : memref<1x4x64x64xbf16, #tpu.memory_space<vmem>>, vector<1x1x64x64xbf16>
    %60 = vector.shape_cast %59 : vector<1x1x64x64xbf16> to vector<64x64xbf16>
    %cst_37 = arith.constant dense<0.000000e+00> : vector<16x64xf32>
    %61 = tpu.matmul %58, %60, %cst_37 {dimension_numbers = #tpu.dot_dimension_numbers<[1], [0], [0], [1], [0, 0, 1, 1], [], []>} : vector<16x64xbf16>, vector<64x64xbf16>, vector<16x64xf32> -> vector<16x64xf32>
    %c0_38 = arith.constant 0 : index
    %c1_39 = arith.constant 1 : index
    %c0_40 = arith.constant 0 : index
    %c0_41 = arith.constant 0 : index
    %62 = vector.load %arg8[%c0_38, %c1_39, %c0_40, %c0_41] : memref<1x4x1x64xf32, #tpu.memory_space<vmem>>, vector<1x1x1x64xf32>
    %63 = vector.shape_cast %62 : vector<1x1x1x64xf32> to vector<1x64xf32>
    %64 = vector.broadcast %63 : vector<1x64xf32> to vector<16x64xf32>
    %65 = arith.addf %61, %64 : vector<16x64xf32>
    %66 = tpu.concatenate %27, %27 in 1 : vector<16x32xf32>, vector<16x32xf32> -> vector<16x64xf32>
    %67 = arith.mulf %66, %65 : vector<16x64xf32>
    %cst_42 = arith.constant 1.250000e-01 : f32
    %68 = vector.broadcast %cst_42 : f32 to vector<16x64xf32>
    %69 = arith.mulf %67, %68 : vector<16x64xf32>
    %c0_43 = arith.constant 0 : index
    %c2 = arith.constant 2 : index
    %c0_44 = arith.constant 0 : index
    %c0_45 = arith.constant 0 : index
    %70 = vector.load %arg7[%c0_43, %c2, %c0_44, %c0_45] : memref<1x4x64x64xbf16, #tpu.memory_space<vmem>>, vector<1x1x64x64xbf16>
    %71 = vector.shape_cast %70 : vector<1x1x64x64xbf16> to vector<64x64xbf16>
    %cst_46 = arith.constant dense<0.000000e+00> : vector<16x64xf32>
    %72 = tpu.matmul %35, %71, %cst_46 {dimension_numbers = #tpu.dot_dimension_numbers<[1], [0], [0], [1], [0, 0, 1, 1], [], []>} : vector<16x64xbf16>, vector<64x64xbf16>, vector<16x64xf32> -> vector<16x64xf32>
    %c0_47 = arith.constant 0 : index
    %c2_48 = arith.constant 2 : index
    %c0_49 = arith.constant 0 : index
    %c0_50 = arith.constant 0 : index
    %73 = vector.load %arg8[%c0_47, %c2_48, %c0_49, %c0_50] : memref<1x4x1x64xf32, #tpu.memory_space<vmem>>, vector<1x1x1x64xf32>
    %74 = vector.shape_cast %73 : vector<1x1x1x64xf32> to vector<1x64xf32>
    %75 = vector.broadcast %74 : vector<1x64xf32> to vector<16x64xf32>
    %76 = arith.addf %72, %75 : vector<16x64xf32>
    %77 = math.absf %76 : vector<16x64xf32>
    %cst_51 = arith.constant 0.000000e+00 : f32
    %78 = vector.broadcast %cst_51 : f32 to vector<16x64xf32>
    %79 = arith.subf %78, %77 : vector<16x64xf32>
    %80 = math.exp %79 : vector<16x64xf32>
    %cst_52 = arith.constant 0.000000e+00 : f32
    %81 = vector.broadcast %cst_52 : f32 to vector<16x64xf32>
    %82 = arith.cmpf oge, %76, %81 : vector<16x64xf32>
    %cst_53 = arith.constant 1.000000e+00 : f32
    %83 = vector.broadcast %cst_53 : f32 to vector<16x64xf32>
    %84 = arith.addf %83, %80 : vector<16x64xf32>
    %cst_54 = arith.constant 1.000000e+00 : f32
    %85 = vector.broadcast %cst_54 : f32 to vector<16x64xf32>
    %86 = arith.divf %85, %84 : vector<16x64xf32>
    %cst_55 = arith.constant 1.000000e+00 : f32
    %87 = vector.broadcast %cst_55 : f32 to vector<16x64xf32>
    %88 = arith.addf %87, %80 : vector<16x64xf32>
    %89 = arith.divf %80, %88 : vector<16x64xf32>
    %90 = arith.select %82, %86, %89 : vector<16x64xi1>, vector<16x64xf32>
    %91 = arith.mulf %76, %90 : vector<16x64xf32>
    %92 = arith.truncf %91 : vector<16x64xf32> to vector<16x64xbf16>
    %c0_56 = arith.constant 0 : index
    %c3 = arith.constant 3 : index
    %c0_57 = arith.constant 0 : index
    %c0_58 = arith.constant 0 : index
    %93 = vector.load %arg7[%c0_56, %c3, %c0_57, %c0_58] : memref<1x4x64x64xbf16, #tpu.memory_space<vmem>>, vector<1x1x64x64xbf16>
    %94 = vector.shape_cast %93 : vector<1x1x64x64xbf16> to vector<64x64xbf16>
    %cst_59 = arith.constant dense<0.000000e+00> : vector<16x64xf32>
    %95 = tpu.matmul %92, %94, %cst_59 {dimension_numbers = #tpu.dot_dimension_numbers<[1], [0], [0], [1], [0, 0, 1, 1], [], []>} : vector<16x64xbf16>, vector<64x64xbf16>, vector<16x64xf32> -> vector<16x64xf32>
    %c0_60 = arith.constant 0 : index
    %c3_61 = arith.constant 3 : index
    %c0_62 = arith.constant 0 : index
    %c0_63 = arith.constant 0 : index
    %96 = vector.load %arg8[%c0_60, %c3_61, %c0_62, %c0_63] : memref<1x4x1x64xf32, #tpu.memory_space<vmem>>, vector<1x1x1x64xf32>
    %97 = vector.shape_cast %96 : vector<1x1x1x64xf32> to vector<1x64xf32>
    %98 = vector.broadcast %97 : vector<1x64xf32> to vector<16x64xf32>
    %99 = arith.addf %95, %98 : vector<16x64xf32>
    %cst_64 = arith.constant dense<0.000000e+00> : vector<64xf32>
    %100 = vector.multi_reduction <add>, %69, %cst_64 [0] : vector<16x64xf32> to vector<64xf32>
    %101 = vector.shape_cast %100 : vector<64xf32> to vector<1x64xf32>
    %cst_65 = arith.constant 1.600000e+01 : f32
    %102 = vector.broadcast %cst_65 : f32 to vector<1x64xf32>
    %103 = arith.divf %101, %102 : vector<1x64xf32>
    %104 = vector.broadcast %103 : vector<1x64xf32> to vector<16x64xf32>
    %105 = arith.subf %69, %104 : vector<16x64xf32>
    %106 = arith.mulf %105, %105 : vector<16x64xf32>
    %cst_66 = arith.constant dense<0.000000e+00> : vector<64xf32>
    %107 = vector.multi_reduction <add>, %106, %cst_66 [0] : vector<16x64xf32> to vector<64xf32>
    %108 = vector.shape_cast %107 : vector<64xf32> to vector<1x64xf32>
    %cst_67 = arith.constant 1.600000e+01 : f32
    %109 = vector.broadcast %cst_67 : f32 to vector<1x64xf32>
    %110 = arith.divf %108, %109 : vector<1x64xf32>
    %111 = vector.broadcast %103 : vector<1x64xf32> to vector<16x64xf32>
    %112 = arith.subf %69, %111 : vector<16x64xf32>
    %cst_68 = arith.constant 9.99999974E-6 : f32
    %113 = vector.broadcast %cst_68 : f32 to vector<1x64xf32>
    %114 = arith.addf %110, %113 : vector<1x64xf32>
    %115 = math.rsqrt %114 : vector<1x64xf32>
    %116 = vector.broadcast %115 : vector<1x64xf32> to vector<16x64xf32>
    %117 = arith.mulf %112, %116 : vector<16x64xf32>
    %c0_69 = arith.constant 0 : index
    %c0_70 = arith.constant 0 : index
    %c0_71 = arith.constant 0 : index
    %c0_72 = arith.constant 0 : index
    %118 = vector.load %arg9[%c0_69, %c0_70, %c0_71, %c0_72] : memref<1x2x1x64xf32, #tpu.memory_space<vmem>>, vector<1x1x1x64xf32>
    %119 = vector.shape_cast %118 : vector<1x1x1x64xf32> to vector<1x64xf32>
    %120 = vector.broadcast %119 : vector<1x64xf32> to vector<16x64xf32>
    %121 = arith.mulf %117, %120 : vector<16x64xf32>
    %c0_73 = arith.constant 0 : index
    %c1_74 = arith.constant 1 : index
    %c0_75 = arith.constant 0 : index
    %c0_76 = arith.constant 0 : index
    %122 = vector.load %arg9[%c0_73, %c1_74, %c0_75, %c0_76] : memref<1x2x1x64xf32, #tpu.memory_space<vmem>>, vector<1x1x1x64xf32>
    %123 = vector.shape_cast %122 : vector<1x1x1x64xf32> to vector<1x64xf32>
    %124 = vector.broadcast %123 : vector<1x64xf32> to vector<16x64xf32>
    %125 = arith.addf %121, %124 : vector<16x64xf32>
    %126 = math.absf %125 : vector<16x64xf32>
    %cst_77 = arith.constant 0.000000e+00 : f32
    %127 = vector.broadcast %cst_77 : f32 to vector<16x64xf32>
    %128 = arith.subf %127, %126 : vector<16x64xf32>
    %129 = math.exp %128 : vector<16x64xf32>
    %cst_78 = arith.constant 0.000000e+00 : f32
    %130 = vector.broadcast %cst_78 : f32 to vector<16x64xf32>
    %131 = arith.cmpf oge, %125, %130 : vector<16x64xf32>
    %cst_79 = arith.constant 1.000000e+00 : f32
    %132 = vector.broadcast %cst_79 : f32 to vector<16x64xf32>
    %133 = arith.addf %132, %129 : vector<16x64xf32>
    %cst_80 = arith.constant 1.000000e+00 : f32
    %134 = vector.broadcast %cst_80 : f32 to vector<16x64xf32>
    %135 = arith.divf %134, %133 : vector<16x64xf32>
    %cst_81 = arith.constant 1.000000e+00 : f32
    %136 = vector.broadcast %cst_81 : f32 to vector<16x64xf32>
    %137 = arith.addf %136, %129 : vector<16x64xf32>
    %138 = arith.divf %129, %137 : vector<16x64xf32>
    %139 = arith.select %131, %135, %138 : vector<16x64xi1>, vector<16x64xf32>
    %140 = arith.mulf %99, %139 : vector<16x64xf32>
    %141 = arith.truncf %140 : vector<16x64xf32> to vector<16x64xbf16>
    %c0_82 = arith.constant 0 : index
    %c0_83 = arith.constant 0 : index
    %c0_84 = arith.constant 0 : index
    %142 = vector.load %arg10[%c0_82, %c0_83, %c0_84] : memref<1x64x32xbf16, #tpu.memory_space<vmem>>, vector<1x64x32xbf16>
    %143 = vector.shape_cast %142 : vector<1x64x32xbf16> to vector<64x32xbf16>
    %cst_85 = arith.constant dense<0.000000e+00> : vector<16x32xf32>
    %144 = tpu.matmul %141, %143, %cst_85 {dimension_numbers = #tpu.dot_dimension_numbers<[1], [0], [0], [1], [0, 0, 1, 1], [], []>} : vector<16x64xbf16>, vector<64x32xbf16>, vector<16x32xf32> -> vector<16x32xf32>
    %c0_86 = arith.constant 0 : index
    %c0_87 = arith.constant 0 : index
    %c0_88 = arith.constant 0 : index
    %c0_89 = arith.constant 0 : index
    %145 = vector.load %arg11[%c0_86, %c0_87, %c0_88, %c0_89] : memref<1x3x1x32xf32, #tpu.memory_space<vmem>>, vector<1x1x1x32xf32>
    %146 = vector.shape_cast %145 : vector<1x1x1x32xf32> to vector<1x32xf32>
    %147 = vector.broadcast %146 : vector<1x32xf32> to vector<16x32xf32>
    %148 = arith.addf %144, %147 : vector<16x32xf32>
    %cst_90 = arith.constant dense<0.000000e+00> : vector<16xf32>
    %149 = vector.multi_reduction <add>, %148, %cst_90 [1] : vector<16x32xf32> to vector<16xf32>
    %150 = vector.shape_cast %149 : vector<16xf32> to vector<16x1xf32>
    %cst_91 = arith.constant 3.200000e+01 : f32
    %151 = vector.broadcast %cst_91 : f32 to vector<16x1xf32>
    %152 = arith.divf %150, %151 : vector<16x1xf32>
    %153 = vector.broadcast %152 : vector<16x1xf32> to vector<16x32xf32>
    %154 = arith.subf %148, %153 : vector<16x32xf32>
    %155 = arith.mulf %154, %154 : vector<16x32xf32>
    %cst_92 = arith.constant dense<0.000000e+00> : vector<16xf32>
    %156 = vector.multi_reduction <add>, %155, %cst_92 [1] : vector<16x32xf32> to vector<16xf32>
    %157 = vector.shape_cast %156 : vector<16xf32> to vector<16x1xf32>
    %cst_93 = arith.constant 3.200000e+01 : f32
    %158 = vector.broadcast %cst_93 : f32 to vector<16x1xf32>
    %159 = arith.divf %157, %158 : vector<16x1xf32>
    %160 = vector.broadcast %152 : vector<16x1xf32> to vector<16x32xf32>
    %161 = arith.subf %148, %160 : vector<16x32xf32>
    %cst_94 = arith.constant 9.99999974E-6 : f32
    %162 = vector.broadcast %cst_94 : f32 to vector<16x1xf32>
    %163 = arith.addf %159, %162 : vector<16x1xf32>
    %164 = math.rsqrt %163 : vector<16x1xf32>
    %165 = vector.broadcast %164 : vector<16x1xf32> to vector<16x32xf32>
    %166 = arith.mulf %161, %165 : vector<16x32xf32>
    %c0_95 = arith.constant 0 : index
    %c1_96 = arith.constant 1 : index
    %c0_97 = arith.constant 0 : index
    %c0_98 = arith.constant 0 : index
    %167 = vector.load %arg11[%c0_95, %c1_96, %c0_97, %c0_98] : memref<1x3x1x32xf32, #tpu.memory_space<vmem>>, vector<1x1x1x32xf32>
    %168 = vector.shape_cast %167 : vector<1x1x1x32xf32> to vector<1x32xf32>
    %169 = vector.broadcast %168 : vector<1x32xf32> to vector<16x32xf32>
    %170 = arith.mulf %166, %169 : vector<16x32xf32>
    %c0_99 = arith.constant 0 : index
    %c2_100 = arith.constant 2 : index
    %c0_101 = arith.constant 0 : index
    %c0_102 = arith.constant 0 : index
    %171 = vector.load %arg11[%c0_99, %c2_100, %c0_101, %c0_102] : memref<1x3x1x32xf32, #tpu.memory_space<vmem>>, vector<1x1x1x32xf32>
    %172 = vector.shape_cast %171 : vector<1x1x1x32xf32> to vector<1x32xf32>
    %173 = vector.broadcast %172 : vector<1x32xf32> to vector<16x32xf32>
    %174 = arith.addf %170, %173 : vector<16x32xf32>
    %175 = math.absf %174 : vector<16x32xf32>
    %cst_103 = arith.constant 0.000000e+00 : f32
    %176 = vector.broadcast %cst_103 : f32 to vector<16x32xf32>
    %177 = arith.subf %176, %175 : vector<16x32xf32>
    %178 = math.exp %177 : vector<16x32xf32>
    %cst_104 = arith.constant 0.000000e+00 : f32
    %179 = vector.broadcast %cst_104 : f32 to vector<16x32xf32>
    %180 = arith.cmpf oge, %174, %179 : vector<16x32xf32>
    %cst_105 = arith.constant 1.000000e+00 : f32
    %181 = vector.broadcast %cst_105 : f32 to vector<16x32xf32>
    %182 = arith.addf %181, %178 : vector<16x32xf32>
    %cst_106 = arith.constant 1.000000e+00 : f32
    %183 = vector.broadcast %cst_106 : f32 to vector<16x32xf32>
    %184 = arith.divf %183, %182 : vector<16x32xf32>
    %cst_107 = arith.constant 1.000000e+00 : f32
    %185 = vector.broadcast %cst_107 : f32 to vector<16x32xf32>
    %186 = arith.addf %185, %178 : vector<16x32xf32>
    %187 = arith.divf %178, %186 : vector<16x32xf32>
    %188 = arith.select %180, %184, %187 : vector<16x32xi1>, vector<16x32xf32>
    %189 = arith.mulf %174, %188 : vector<16x32xf32>
    %190 = arith.truncf %189 : vector<16x32xf32> to vector<16x32xbf16>
    %cst_108 = arith.constant dense<0.000000e+00> : vector<8x32xf32>
    %191 = tpu.matmul %14, %190, %cst_108 {dimension_numbers = #tpu.dot_dimension_numbers<[0], [0], [1], [1], [0, 1, 1, 1], [], []>} : vector<16x8xbf16>, vector<16x32xbf16>, vector<8x32xf32> -> vector<8x32xf32>
    %c0_109 = arith.constant 0 : index
    %c0_110 = arith.constant 0 : index
    %c0_111 = arith.constant 0 : index
    %192 = vector.load %arg12[%c0_109, %c0_110, %c0_111] : memref<1x8x32xf32, #tpu.memory_space<vmem>>, vector<1x8x32xf32>
    %193 = vector.shape_cast %192 : vector<1x8x32xf32> to vector<8x32xf32>
    %194 = vector.shape_cast %191 : vector<8x32xf32> to vector<1x8x32xf32>
    tpu.vector_store %arg12[%c0_109, %c0_110, %c0_111], %194 {strides = array<i32>} : memref<1x8x32xf32, #tpu.memory_space<vmem>>, vector<1x8x32xf32>,
    return
  }
  func.func @transform_0(%arg0: i32) -> (i32, i32) {
    %c0_i32 = arith.constant 0 : i32
    %c0_i32_0 = arith.constant 0 : i32
    %c0_i32_1 = arith.constant 0 : i32
    return %c0_i32, %c0_i32_0 : i32, i32
  }
  func.func @transform_1(%arg0: i32) -> (i32, i32) {
    %c0_i32 = arith.constant 0 : i32
    %c0_i32_0 = arith.constant 0 : i32
    %c0_i32_1 = arith.constant 0 : i32
    return %c0_i32, %c0_i32_0 : i32, i32
  }
  func.func @transform_2(%arg0: i32) -> (i32, i32) {
    %c0_i32 = arith.constant 0 : i32
    %c0_i32_0 = arith.constant 0 : i32
    %c0_i32_1 = arith.constant 0 : i32
    return %c0_i32, %c0_i32_0 : i32, i32
  }
  func.func @transform_3(%arg0: i32) -> (i32, i32, i32) {
    %c0_i32 = arith.constant 0 : i32
    %c0_i32_0 = arith.constant 0 : i32
    %c0_i32_1 = arith.constant 0 : i32
    return %arg0, %c0_i32, %c0_i32_0 : i32, i32, i32
  }
  func.func @transform_4(%arg0: i32) -> (i32, i32, i32) {
    %c0_i32 = arith.constant 0 : i32
    %c0_i32_0 = arith.constant 0 : i32
    %c0_i32_1 = arith.constant 0 : i32
    return %arg0, %c0_i32, %c0_i32_0 : i32, i32, i32
  }
  func.func @transform_5(%arg0: i32) -> (i32, i32, i32) {
    %c0_i32 = arith.constant 0 : i32
    %c0_i32_0 = arith.constant 0 : i32
    %c0_i32_1 = arith.constant 0 : i32
    return %arg0, %c0_i32, %c0_i32_0 : i32, i32, i32
  }
  func.func @transform_6(%arg0: i32) -> (i32, i32, i32, i32) {
    %c0_i32 = arith.constant 0 : i32
    %c0_i32_0 = arith.constant 0 : i32
    %c0_i32_1 = arith.constant 0 : i32
    %c0_i32_2 = arith.constant 0 : i32
    return %arg0, %c0_i32, %c0_i32_0, %c0_i32_1 : i32, i32, i32, i32
  }
  func.func @transform_7(%arg0: i32) -> (i32, i32, i32, i32) {
    %c0_i32 = arith.constant 0 : i32
    %c0_i32_0 = arith.constant 0 : i32
    %c0_i32_1 = arith.constant 0 : i32
    %c0_i32_2 = arith.constant 0 : i32
    return %arg0, %c0_i32, %c0_i32_0, %c0_i32_1 : i32, i32, i32, i32
  }
  func.func @transform_8(%arg0: i32) -> (i32, i32, i32, i32) {
    %c0_i32 = arith.constant 0 : i32
    %c0_i32_0 = arith.constant 0 : i32
    %c0_i32_1 = arith.constant 0 : i32
    %c0_i32_2 = arith.constant 0 : i32
    return %arg0, %c0_i32, %c0_i32_0, %c0_i32_1 : i32, i32, i32, i32
  }
  func.func @transform_9(%arg0: i32) -> (i32, i32, i32) {
    %c0_i32 = arith.constant 0 : i32
    %c0_i32_0 = arith.constant 0 : i32
    %c0_i32_1 = arith.constant 0 : i32
    return %arg0, %c0_i32, %c0_i32_0 : i32, i32, i32
  }
  func.func @transform_10(%arg0: i32) -> (i32, i32, i32, i32) {
    %c0_i32 = arith.constant 0 : i32
    %c0_i32_0 = arith.constant 0 : i32
    %c0_i32_1 = arith.constant 0 : i32
    %c0_i32_2 = arith.constant 0 : i32
    return %arg0, %c0_i32, %c0_i32_0, %c0_i32_1 : i32, i32, i32, i32
  }
  func.func @transform_11(%arg0: i32) -> (i32, i32, i32) {
    %c0_i32 = arith.constant 0 : i32
    %c0_i32_0 = arith.constant 0 : i32
    %c0_i32_1 = arith.constant 0 : i32
    return %arg0, %c0_i32, %c0_i32_0 : i32, i32, i32
  }
}

</mosaic_0001>

<llo_original>
// kernel: tpu_custom_call.1
$region0: #{tpu_custom_call.1}
  #allocation0 [shape = 'u32[]', space=smem, size = 0x4, offset = 0x4, fixed_abs, tag = 'smem constant byte address 0x4 - core index']
  #allocation1 [shape = 'u32[144,128]{1,0:T(1,128)}', space=vmem, size = 0x12000, scoped, tag = 'internal scratch']
  %s0 = inlined_call_operand.hbm [shape: bf16[8,32], index: 0, kind: input, shape index: {}]
  %s1 = inlined_call_operand.vmem [shape: bf16[16,32], index: 1, kind: input, shape index: {}]
  %s2 = inlined_call_operand.vmem [shape: s32[16,2], index: 2, kind: input, shape index: {}]
  %s3 = inlined_call_operand.vmem [shape: bf16[2,32,64], index: 3, kind: input, shape index: {}]
  %s4 = inlined_call_operand.vmem [shape: bf16[2,32,32], index: 4, kind: input, shape index: {}]
  %s5 = inlined_call_operand.vmem [shape: bf16[2,32,64], index: 5, kind: input, shape index: {}]
  %s6 = inlined_call_operand.hbm [shape: bf16[2,4,64,64], index: 6, kind: input, shape index: {}]
  %s7 = inlined_call_operand.vmem [shape: f32[2,4,1,64], index: 7, kind: input, shape index: {}]
  %s8 = inlined_call_operand.hbm [shape: f32[2,2,1,64], index: 8, kind: input, shape index: {}]
  %s9 = inlined_call_operand.vmem [shape: bf16[2,64,32], index: 9, kind: input, shape index: {}]
  %s10 = inlined_call_operand.vmem [shape: f32[2,3,1,32], index: 10, kind: input, shape index: {}]
  %s11 = inlined_call_operand.hbm [shape: f32[2,8,32], index: 11, kind: output, shape index: {}]
  %s12 = sld [smem:[#allocation0]]
  $region89: #{tpu_custom_call.1} parent=0
    _
  %s14 = ssub.s32 1, %s12
  %s15 = scalar_select 0, %s14, %s12
  $region1: #{tpu_custom_call.1} parent=0
    #allocation2 [shape = 'u8[2048]{0}', space=vmem, size = 0x800, scoped, tag = 'input window, operand 0, single buffered']
    #allocation3 [shape = 's32[2]{0}', space=sflag, size = 0x8, scoped, tag = 'scoped memory for tpu_custom_call.1']
    #allocation4 [shape = 's32[2]{0}', space=sflag, size = 0x8, scoped, tag = 'scoped memory for tpu_custom_call.1']
    #allocation5 [shape = 'u8[131072]{0}', space=vmem, size = 0x20000, scoped, tag = 'input window, operand 6']
    #allocation6 [shape = 's32[2]{0}', space=sflag, size = 0x8, scoped, tag = 'scoped memory for tpu_custom_call.1']
    #allocation7 [shape = 'u8[2048]{0}', space=vmem, size = 0x800, scoped, tag = 'input window, operand 8']
    #allocation8 [shape = 'u8[8192]{0}', space=vmem, size = 0x2000, scoped, tag = 'output window, operand 0']
    %16 = vsyncpa [#allocation3], 0
    %17 = vsyncpa [#allocation6], 0
    %s18 = scalar_lea.sflag [#allocation6], 1
    %19 = vsyncpa %s18, 0
    %20 = vsyncpa [#allocation4], 0
    %s21 = scalar_lea.sflag [#allocation4], 1
    %22 = vsyncpa %s21, 0
    loop: start=0, step=1, limit=4
    $region2: #{tpu_custom_call.1} parent=1 // loop_pre_header
      _
    $region3: #{tpu_custom_call.1} parent=1 // loop_header
      %s24 = sphi 0, %s28
      %p25 = scmp.ge.s32.totalorder %s24, 4
      %s32 = sphi 0, %s32
      %s34 = sphi 0, %s32
      %s35 = sphi 0, %s34
      %s49 = sphi 0, %s35
      %s53 = sphi 0, %s53
      %s55 = sphi 0, %s53
      %s56 = sphi 0, %s55
      %s70 = sphi 0, %s56
      %s74 = sphi 0, %s74
      %s76 = sphi 0, %s74
      %s77 = sphi 0, %s76
      %s91 = sphi 0, %s77
      %s97 = sphi 0, %s99
      %s100 = sphi 0, %s97
      %s101 = sphi 0, %s100
      %s117 = sphi 0, %s101
      %s123 = sphi 0, %s125
      %s126 = sphi 0, %s123
      %s127 = sphi 0, %s126
      %s143 = sphi 0, %s127
      %s149 = sphi 0, %s151
      %s152 = sphi 0, %s149
      %s153 = sphi 0, %s152
      %s169 = sphi 0, %s153
      %s175 = sphi 0, %s177
      %s178 = sphi 0, %s175
      %s179 = sphi 0, %s178
      %s195 = sphi 0, %s179
      %s201 = sphi 0, %s203
      %s204 = sphi 0, %s201
      %s205 = sphi 0, %s204
      %s221 = sphi 0, %s205
      %s227 = sphi 0, %s229
      %s230 = sphi 0, %s227
      %s231 = sphi 0, %s230
      %s247 = sphi 0, %s231
      %s253 = sphi 0, %s255
      %s256 = sphi 0, %s253
      %s257 = sphi 0, %s256
      %s273 = sphi 0, %s257
      %s279 = sphi 0, %s281
      %s282 = sphi 0, %s279
      %s283 = sphi 0, %s282
      %s299 = sphi 0, %s283
      %s305 = sphi 0, %s307
      %s308 = sphi 0, %s305
      %s309 = sphi 0, %s308
      %s325 = sphi 0, %s309
    $region4: #{tpu_custom_call.1} parent=1 // loop_header_branch
      %27 = sbr.rel (%p25) target = $region8
    $region5: #{tpu_custom_call.1} parent=1 // loop_body
      %s29 = ssub.s32 %s24, 1
      %s30 = ssub.s32 %s24, 2
      %s31 = sadd.s32 %s24, 1
      %s33 = sadd.s32 %s32, 1
      %p36 = scmp.eq.s32.totalorder %s24, 1
      %p37 = scmp.ne.s32.totalorder %s32, %s34
      %p38 = scmp.eq.s32.totalorder %s24, 0
      %p39 = por %p37, %p38
      %p40 = scmp.ne.s32.totalorder %s32, %s34
      %p41 = scmp.eq.s32.totalorder %s29, 1
      %p42 = por %p40, %p41
      %p43 = scmp.ne.s32.totalorder %s34, %s35
      %p44 = scmp.eq.s32.totalorder %s29, 0
      %p45 = por %p43, %p44
      %p46 = scmp.ne.s32.totalorder %s34, %s35
      %p47 = scmp.eq.s32.totalorder %s30, 1
      %p48 = por %p46, %p47
      %p50 = scmp.ne.s32.totalorder %s35, %s49
      %p51 = scmp.eq.s32.totalorder %s30, 0
      %p52 = por %p50, %p51
      %s54 = sadd.s32 %s53, 1
      %p57 = scmp.eq.s32.totalorder %s24, 1
      %p58 = scmp.ne.s32.totalorder %s53, %s55
      %p59 = scmp.eq.s32.totalorder %s24, 0
      %p60 = por %p58, %p59
      %p61 = scmp.ne.s32.totalorder %s53, %s55
      %p62 = scmp.eq.s32.totalorder %s29, 1
      %p63 = por %p61, %p62
      %p64 = scmp.ne.s32.totalorder %s55, %s56
      %p65 = scmp.eq.s32.totalorder %s29, 0
      %p66 = por %p64, %p65
      %p67 = scmp.ne.s32.totalorder %s55, %s56
      %p68 = scmp.eq.s32.totalorder %s30, 1
      %p69 = por %p67, %p68
      %p71 = scmp.ne.s32.totalorder %s56, %s70
      %p72 = scmp.eq.s32.totalorder %s30, 0
      %p73 = por %p71, %p72
      %s75 = sadd.s32 %s74, 1
      %p78 = scmp.eq.s32.totalorder %s24, 1
      %p79 = scmp.ne.s32.totalorder %s74, %s76
      %p80 = scmp.eq.s32.totalorder %s24, 0
      %p81 = por %p79, %p80
      %p82 = scmp.ne.s32.totalorder %s74, %s76
      %p83 = scmp.eq.s32.totalorder %s29, 1
      %p84 = por %p82, %p83
      %p85 = scmp.ne.s32.totalorder %s76, %s77
      %p86 = scmp.eq.s32.totalorder %s29, 0
      %p87 = por %p85, %p86
      %p88 = scmp.ne.s32.totalorder %s76, %s77
      %p89 = scmp.eq.s32.totalorder %s30, 1
      %p90 = por %p88, %p89
      %p92 = scmp.ne.s32.totalorder %s77, %s91
      %p93 = scmp.eq.s32.totalorder %s30, 0
      %p94 = por %p92, %p93
      %s95 = ssub.s32 %s24, %s31
      %p96 = scmp.eq.s32.totalorder %s95, 0
      %s98 = sadd.s32 %s97, 1
      %s99 = scalar_select %p96, %s97, %s98
      %p102 = pneg %p96
      %p103 = scmp.eq.s32.totalorder %s24, 1
      %p104 = por %p102, %p103
      %p105 = scmp.ne.s32.totalorder %s97, %s100
      %p106 = scmp.eq.s32.totalorder %s24, 0
      %p107 = por %p105, %p106
      %p108 = scmp.ne.s32.totalorder %s97, %s100
      %p109 = scmp.eq.s32.totalorder %s29, 1
      %p110 = por %p108, %p109
      %p111 = scmp.ne.s32.totalorder %s100, %s101
      %p112 = scmp.eq.s32.totalorder %s29, 0
      %p113 = por %p111, %p112
      %p114 = scmp.ne.s32.totalorder %s100, %s101
      %p115 = scmp.eq.s32.totalorder %s30, 1
      %p116 = por %p114, %p115
      %p118 = scmp.ne.s32.totalorder %s101, %s117
      %p119 = scmp.eq.s32.totalorder %s30, 0
      %p120 = por %p118, %p119
      %s121 = ssub.s32 %s24, %s31
      %p122 = scmp.eq.s32.totalorder %s121, 0
      %s124 = sadd.s32 %s123, 1
      %s125 = scalar_select %p122, %s123, %s124
      %p128 = pneg %p122
      %p129 = scmp.eq.s32.totalorder %s24, 1
      %p130 = por %p128, %p129
      %p131 = scmp.ne.s32.totalorder %s123, %s126
      %p132 = scmp.eq.s32.totalorder %s24, 0
      %p133 = por %p131, %p132
      %p134 = scmp.ne.s32.totalorder %s123, %s126
      %p135 = scmp.eq.s32.totalorder %s29, 1
      %p136 = por %p134, %p135
      %p137 = scmp.ne.s32.totalorder %s126, %s127
      %p138 = scmp.eq.s32.totalorder %s29, 0
      %p139 = por %p137, %p138
      %p140 = scmp.ne.s32.totalorder %s126, %s127
      %p141 = scmp.eq.s32.totalorder %s30, 1
      %p142 = por %p140, %p141
      %p144 = scmp.ne.s32.totalorder %s127, %s143
      %p145 = scmp.eq.s32.totalorder %s30, 0
      %p146 = por %p144, %p145
      %s147 = ssub.s32 %s24, %s31
      %p148 = scmp.eq.s32.totalorder %s147, 0
      %s150 = sadd.s32 %s149, 1
      %s151 = scalar_select %p148, %s149, %s150
      %p154 = pneg %p148
      %p155 = scmp.eq.s32.totalorder %s24, 1
      %p156 = por %p154, %p155
      %p157 = scmp.ne.s32.totalorder %s149, %s152
      %p158 = scmp.eq.s32.totalorder %s24, 0
      %p159 = por %p157, %p158
      %p160 = scmp.ne.s32.totalorder %s149, %s152
      %p161 = scmp.eq.s32.totalorder %s29, 1
      %p162 = por %p160, %p161
      %p163 = scmp.ne.s32.totalorder %s152, %s153
      %p164 = scmp.eq.s32.totalorder %s29, 0
      %p165 = por %p163, %p164
      %p166 = scmp.ne.s32.totalorder %s152, %s153
      %p167 = scmp.eq.s32.totalorder %s30, 1
      %p168 = por %p166, %p167
      %p170 = scmp.ne.s32.totalorder %s153, %s169
      %p171 = scmp.eq.s32.totalorder %s30, 0
      %p172 = por %p170, %p171
      %s173 = ssub.s32 %s24, %s31
      %p174 = scmp.eq.s32.totalorder %s173, 0
      %s176 = sadd.s32 %s175, 1
      %s177 = scalar_select %p174, %s175, %s176
      %p180 = pneg %p174
      %p181 = scmp.eq.s32.totalorder %s24, 1
      %p182 = por %p180, %p181
      %p183 = scmp.ne.s32.totalorder %s175, %s178
      %p184 = scmp.eq.s32.totalorder %s24, 0
      %p185 = por %p183, %p184
      %p186 = scmp.ne.s32.totalorder %s175, %s178
      %p187 = scmp.eq.s32.totalorder %s29, 1
      %p188 = por %p186, %p187
      %p189 = scmp.ne.s32.totalorder %s178, %s179
      %p190 = scmp.eq.s32.totalorder %s29, 0
      %p191 = por %p189, %p190
      %p192 = scmp.ne.s32.totalorder %s178, %s179
      %p193 = scmp.eq.s32.totalorder %s30, 1
      %p194 = por %p192, %p193
      %p196 = scmp.ne.s32.totalorder %s179, %s195
      %p197 = scmp.eq.s32.totalorder %s30, 0
      %p198 = por %p196, %p197
      %s199 = ssub.s32 %s24, %s31
      %p200 = scmp.eq.s32.totalorder %s199, 0
      %s202 = sadd.s32 %s201, 1
      %s203 = scalar_select %p200, %s201, %s202
      %p206 = pneg %p200
      %p207 = scmp.eq.s32.totalorder %s24, 1
      %p208 = por %p206, %p207
      %p209 = scmp.ne.s32.totalorder %s201, %s204
      %p210 = scmp.eq.s32.totalorder %s24, 0
      %p211 = por %p209, %p210
      %p212 = scmp.ne.s32.totalorder %s201, %s204
      %p213 = scmp.eq.s32.totalorder %s29, 1
      %p214 = por %p212, %p213
      %p215 = scmp.ne.s32.totalorder %s204, %s205
      %p216 = scmp.eq.s32.totalorder %s29, 0
      %p217 = por %p215, %p216
      %p218 = scmp.ne.s32.totalorder %s204, %s205
      %p219 = scmp.eq.s32.totalorder %s30, 1
      %p220 = por %p218, %p219
      %p222 = scmp.ne.s32.totalorder %s205, %s221
      %p223 = scmp.eq.s32.totalorder %s30, 0
      %p224 = por %p222, %p223
      %s225 = ssub.s32 %s24, %s31
      %p226 = scmp.eq.s32.totalorder %s225, 0
      %s228 = sadd.s32 %s227, 1
      %s229 = scalar_select %p226, %s227, %s228
      %p232 = pneg %p226
      %p233 = scmp.eq.s32.totalorder %s24, 1
      %p234 = por %p232, %p233
      %p235 = scmp.ne.s32.totalorder %s227, %s230
      %p236 = scmp.eq.s32.totalorder %s24, 0
      %p237 = por %p235, %p236
      %p238 = scmp.ne.s32.totalorder %s227, %s230
      %p239 = scmp.eq.s32.totalorder %s29, 1
      %p240 = por %p238, %p239
      %p241 = scmp.ne.s32.totalorder %s230, %s231
      %p242 = scmp.eq.s32.totalorder %s29, 0
      %p243 = por %p241, %p242
      %p244 = scmp.ne.s32.totalorder %s230, %s231
      %p245 = scmp.eq.s32.totalorder %s30, 1
      %p246 = por %p244, %p245
      %p248 = scmp.ne.s32.totalorder %s231, %s247
      %p249 = scmp.eq.s32.totalorder %s30, 0
      %p250 = por %p248, %p249
      %s251 = ssub.s32 %s24, %s31
      %p252 = scmp.eq.s32.totalorder %s251, 0
      %s254 = sadd.s32 %s253, 1
      %s255 = scalar_select %p252, %s253, %s254
      %p258 = pneg %p252
      %p259 = scmp.eq.s32.totalorder %s24, 1
      %p260 = por %p258, %p259
      %p261 = scmp.ne.s32.totalorder %s253, %s256
      %p262 = scmp.eq.s32.totalorder %s24, 0
      %p263 = por %p261, %p262
      %p264 = scmp.ne.s32.totalorder %s253, %s256
      %p265 = scmp.eq.s32.totalorder %s29, 1
      %p266 = por %p264, %p265
      %p267 = scmp.ne.s32.totalorder %s256, %s257
      %p268 = scmp.eq.s32.totalorder %s29, 0
      %p269 = por %p267, %p268
      %p270 = scmp.ne.s32.totalorder %s256, %s257
      %p271 = scmp.eq.s32.totalorder %s30, 1
      %p272 = por %p270, %p271
      %p274 = scmp.ne.s32.totalorder %s257, %s273
      %p275 = scmp.eq.s32.totalorder %s30, 0
      %p276 = por %p274, %p275
      %s277 = ssub.s32 %s24, %s31
      %p278 = scmp.eq.s32.totalorder %s277, 0
      %s280 = sadd.s32 %s279, 1
      %s281 = scalar_select %p278, %s279, %s280
      %p284 = pneg %p278
      %p285 = scmp.eq.s32.totalorder %s24, 1
      %p286 = por %p284, %p285
      %p287 = scmp.ne.s32.totalorder %s279, %s282
      %p288 = scmp.eq.s32.totalorder %s24, 0
      %p289 = por %p287, %p288
      %p290 = scmp.ne.s32.totalorder %s279, %s282
      %p291 = scmp.eq.s32.totalorder %s29, 1
      %p292 = por %p290, %p291
      %p293 = scmp.ne.s32.totalorder %s282, %s283
      %p294 = scmp.eq.s32.totalorder %s29, 0
      %p295 = por %p293, %p294
      %p296 = scmp.ne.s32.totalorder %s282, %s283
      %p297 = scmp.eq.s32.totalorder %s30, 1
      %p298 = por %p296, %p297
      %p300 = scmp.ne.s32.totalorder %s283, %s299
      %p301 = scmp.eq.s32.totalorder %s30, 0
      %p302 = por %p300, %p301
      %s303 = ssub.s32 %s24, %s31
      %p304 = scmp.eq.s32.totalorder %s303, 0
      %s306 = sadd.s32 %s305, 1
      %s307 = scalar_select %p304, %s305, %s306
      %p310 = pneg %p304
      %p311 = scmp.eq.s32.totalorder %s24, 1
      %p312 = por %p310, %p311
      %p313 = scmp.ne.s32.totalorder %s305, %s308
      %p314 = scmp.eq.s32.totalorder %s24, 0
      %p315 = por %p313, %p314
      %p316 = scmp.ne.s32.totalorder %s305, %s308
      %p317 = scmp.eq.s32.totalorder %s29, 1
      %p318 = por %p316, %p317
      %p319 = scmp.ne.s32.totalorder %s308, %s309
      %p320 = scmp.eq.s32.totalorder %s29, 0
      %p321 = por %p319, %p320
      %p322 = scmp.ne.s32.totalorder %s308, %s309
      %p323 = scmp.eq.s32.totalorder %s30, 1
      %p324 = por %p322, %p323
      %p326 = scmp.ne.s32.totalorder %s309, %s325
      %p327 = scmp.eq.s32.totalorder %s30, 0
      %p328 = por %p326, %p327
      %p329 = scmp.le.s32.totalorder 1, %s24
      %p330 = scmp.lt.s32.totalorder %s24, 3
      %p331 = pnand %p329, %p330
      %p332 = pneg %p331
      // Predicated region
      $region9: #{tpu_custom_call.1} parent=5 // pred_check
        _
      $region10: #{tpu_custom_call.1} parent=5 // pred_check_branch
        %334 = sbr.rel (%p331) target = $region12
      $region11: #{tpu_custom_call.1} parent=5 // pred_region
        %s335 = ssub.s32 %s24, 1
        // Predicated region
        $region13: #{tpu_custom_call.1} parent=11 // pred_check
          %p336 = pneg %p45
        $region14: #{tpu_custom_call.1} parent=11 // pred_check_branch
          %338 = sbr.rel (%p336) target = $region16
        $region15: #{tpu_custom_call.1} parent=11 // pred_region
          %s340 = ssub.s32 64, 64
          %341 = vsyncadd [#allocation3], %s340
          %s343 = sshll.u32 [#allocation2], 4
          %s344 = int_to_ptr.vmem [resolvable:$true] %s343
          %346 = dma.hbm_to_vmem [thread:$0]  %s0, 64, %s344, [#allocation3]
        $region16: #{tpu_custom_call.1} parent=11 // pred_fallthru
          _
        // Predicated region
        $region17: #{tpu_custom_call.1} parent=11 // pred_check
          %p347 = pneg %p66
        $region18: #{tpu_custom_call.1} parent=11 // pred_check_branch
          %349 = sbr.rel (%p347) target = $region20
        $region19: #{tpu_custom_call.1} parent=11 // pred_region
          _
        $region20: #{tpu_custom_call.1} parent=11 // pred_fallthru
          _
        // Predicated region
        $region21: #{tpu_custom_call.1} parent=11 // pred_check
          %p350 = pneg %p87
        $region22: #{tpu_custom_call.1} parent=11 // pred_check_branch
          %352 = sbr.rel (%p350) target = $region24
        $region23: #{tpu_custom_call.1} parent=11 // pred_region
          _
        $region24: #{tpu_custom_call.1} parent=11 // pred_fallthru
          _
      $region12: #{tpu_custom_call.1} parent=5 // pred_fallthru
        _
      %p353 = scmp.lt.s32.totalorder %s24, 2
      // Predicated region
      $region25: #{tpu_custom_call.1} parent=5 // pred_check
        %p354 = pneg %p353
      $region26: #{tpu_custom_call.1} parent=5 // pred_check_branch
        %356 = sbr.rel (%p354) target = $region28
      $region27: #{tpu_custom_call.1} parent=5 // pred_region
        // Predicated region
        $region29: #{tpu_custom_call.1} parent=27 // pred_check
          %p357 = pneg %p107
        $region30: #{tpu_custom_call.1} parent=27 // pred_check_branch
          %359 = sbr.rel (%p357) target = $region32
        $region31: #{tpu_custom_call.1} parent=27 // pred_region
          %p360 = scmp.lt.s32.totalorder %s24, 1
          %s361 = scalar_select %p360, %s24, 1
          %s362 = smul.addr %s361, 4
          %s363 = smul.addr %s362, 4
          %s364 = scalar_lea.vmem %s3, %s363
        $region32: #{tpu_custom_call.1} parent=27 // pred_fallthru
          _
        // Predicated region
        $region33: #{tpu_custom_call.1} parent=27 // pred_check
          %p365 = pneg %p133
        $region34: #{tpu_custom_call.1} parent=27 // pred_check_branch
          %367 = sbr.rel (%p365) target = $region36
        $region35: #{tpu_custom_call.1} parent=27 // pred_region
          %p368 = scmp.lt.s32.totalorder %s24, 1
          %s369 = scalar_select %p368, %s24, 1
          %s370 = smul.addr %s369, 4
          %s371 = smul.addr %s370, 4
          %s372 = scalar_lea.vmem %s4, %s371
        $region36: #{tpu_custom_call.1} parent=27 // pred_fallthru
          _
        // Predicated region
        $region37: #{tpu_custom_call.1} parent=27 // pred_check
          %p373 = pneg %p159
        $region38: #{tpu_custom_call.1} parent=27 // pred_check_branch
          %375 = sbr.rel (%p373) target = $region40
        $region39: #{tpu_custom_call.1} parent=27 // pred_region
          %p376 = scmp.lt.s32.totalorder %s24, 1
          %s377 = scalar_select %p376, %s24, 1
          %s378 = smul.addr %s377, 4
          %s379 = smul.addr %s378, 4
          %s380 = scalar_lea.vmem %s5, %s379
        $region40: #{tpu_custom_call.1} parent=27 // pred_fallthru
          _
        // Predicated region
        $region41: #{tpu_custom_call.1} parent=27 // pred_check
          %p381 = pneg %p185
        $region42: #{tpu_custom_call.1} parent=27 // pred_check_branch
          %383 = sbr.rel (%p381) target = $region44
        $region43: #{tpu_custom_call.1} parent=27 // pred_region
          %s384 = sand.u32 %s24, 1
          %s385 = scalar_lea.sflag [#allocation6], %s384
          %s386 = sand.u32 %s175, 1
          %s387 = smul.addr %s386, 128
          %s388 = scalar_lea.vmem [#allocation5], %s387
          %s390 = ssub.s32 2048, 2048
          %391 = vsyncadd %s385, %s390
          %s392 = smul.addr %s24, 32
          %s393 = smul.addr %s392, 64
          %s394 = scalar_lea.hbm %s6, %s393
          %s395 = sshll.u32 %s388, 4
          %s396 = int_to_ptr.vmem [resolvable:$true] %s395
          %401 = dma.hbm_to_vmem [thread:$0]  %s394, 2048, %s396, %s385, 64, 64, 4
        $region44: #{tpu_custom_call.1} parent=27 // pred_fallthru
          _
        // Predicated region
        $region45: #{tpu_custom_call.1} parent=27 // pred_check
          %p402 = pneg %p211
        $region46: #{tpu_custom_call.1} parent=27 // pred_check_branch
          %404 = sbr.rel (%p402) target = $region48
        $region47: #{tpu_custom_call.1} parent=27 // pred_region
          %p405 = scmp.lt.s32.totalorder %s24, 1
          %s406 = scalar_select %p405, %s24, 1
          %s407 = smul.addr %s406, 4
          %s408 = scalar_lea.vmem %s7, %s407
        $region48: #{tpu_custom_call.1} parent=27 // pred_fallthru
          _
        // Predicated region
        $region49: #{tpu_custom_call.1} parent=27 // pred_check
          %p409 = pneg %p237
        $region50: #{tpu_custom_call.1} parent=27 // pred_check_branch
          %411 = sbr.rel (%p409) target = $region52
        $region51: #{tpu_custom_call.1} parent=27 // pred_region
          %s412 = sand.u32 %s24, 1
          %s413 = scalar_lea.sflag [#allocation6], %s412
          %s414 = sand.u32 %s227, 1
          %s415 = smul.addr %s414, 2
          %s416 = scalar_lea.vmem [#allocation7], %s415
          %s418 = ssub.s32 32, 32
          %419 = vsyncadd %s413, %s418
          %s420 = smul.addr %s24, 2
          %s421 = smul.addr %s420, 16
          %s422 = scalar_lea.hbm %s8, %s421
          %s423 = sshll.u32 %s416, 4
          %s424 = int_to_ptr.vmem [resolvable:$true] %s423
          %429 = dma.hbm_to_vmem [thread:$0]  %s422, 32, %s424, %s413, 16, 16, 1
        $region52: #{tpu_custom_call.1} parent=27 // pred_fallthru
          _
        // Predicated region
        $region53: #{tpu_custom_call.1} parent=27 // pred_check
          %p430 = pneg %p263
        $region54: #{tpu_custom_call.1} parent=27 // pred_check_branch
          %432 = sbr.rel (%p430) target = $region56
        $region55: #{tpu_custom_call.1} parent=27 // pred_region
          %p433 = scmp.lt.s32.totalorder %s24, 1
          %s434 = scalar_select %p433, %s24, 1
          %s435 = smul.addr %s434, 8
          %s436 = smul.addr %s435, 4
          %s437 = scalar_lea.vmem %s9, %s436
        $region56: #{tpu_custom_call.1} parent=27 // pred_fallthru
          _
        // Predicated region
        $region57: #{tpu_custom_call.1} parent=27 // pred_check
          %p438 = pneg %p289
        $region58: #{tpu_custom_call.1} parent=27 // pred_check_branch
          %440 = sbr.rel (%p438) target = $region60
        $region59: #{tpu_custom_call.1} parent=27 // pred_region
          %p441 = scmp.lt.s32.totalorder %s24, 1
          %s442 = scalar_select %p441, %s24, 1
          %s443 = smul.addr %s442, 3
          %s444 = scalar_lea.vmem %s10, %s443
        $region60: #{tpu_custom_call.1} parent=27 // pred_fallthru
          _
      $region28: #{tpu_custom_call.1} parent=5 // pred_fallthru
        _
      %p445 = scmp.le.s32.totalorder 1, %s24
      %p446 = scmp.lt.s32.totalorder %s24, 3
      %p447 = pnand %p445, %p446
      %p448 = pneg %p447
      // Predicated region
      $region61: #{tpu_custom_call.1} parent=5 // pred_check
        _
      $region62: #{tpu_custom_call.1} parent=5 // pred_check_branch
        %450 = sbr.rel (%p447) target = $region64
      $region63: #{tpu_custom_call.1} parent=5 // pred_region
        %s451 = ssub.s32 %s24, 1
        // Predicated region
        $region65: #{tpu_custom_call.1} parent=63 // pred_check
          %p452 = pneg %p45
        $region66: #{tpu_custom_call.1} parent=63 // pred_check_branch
          %454 = sbr.rel (%p452) target = $region68
        $region67: #{tpu_custom_call.1} parent=63 // pred_region
          %455 = dma.done [#allocation3], 64
        $region68: #{tpu_custom_call.1} parent=63 // pred_fallthru
          _
        %s456 = sand.u32 %s29, 1
        %s457 = scalar_lea.sflag [#allocation6], %s456
        %s458 = sand.u32 %s178, 1
        %s459 = smul.addr %s458, 128
        %s460 = scalar_lea.vmem [#allocation5], %s459
        // Predicated region
        $region69: #{tpu_custom_call.1} parent=63 // pred_check
          %p461 = pneg %p191
        $region70: #{tpu_custom_call.1} parent=63 // pred_check_branch
          %463 = sbr.rel (%p461) target = $region72
        $region71: #{tpu_custom_call.1} parent=63 // pred_region
          %464 = dma.done %s457, 2048
        $region72: #{tpu_custom_call.1} parent=63 // pred_fallthru
          _
        %s465 = sand.u32 %s29, 1
        %s466 = scalar_lea.sflag [#allocation6], %s465
        %s467 = sand.u32 %s230, 1
        %s468 = smul.addr %s467, 2
        %s469 = scalar_lea.vmem [#allocation7], %s468
        // Predicated region
        $region73: #{tpu_custom_call.1} parent=63 // pred_check
          %p470 = pneg %p243
        $region74: #{tpu_custom_call.1} parent=63 // pred_check_branch
          %472 = sbr.rel (%p470) target = $region76
        $region75: #{tpu_custom_call.1} parent=63 // pred_region
          %473 = dma.done %s466, 32
        $region76: #{tpu_custom_call.1} parent=63 // pred_fallthru
          _
        %p474 = pneg %p45
        %p475 = pneg %p42
        %p476 = pneg %p66
        %p477 = pneg %p63
        %p478 = pneg %p87
        %p479 = pneg %p84
        %p480 = scmp.lt.s32.totalorder %s29, 1
        %s481 = scalar_select %p480, %s29, 1
        %s482 = smul.addr %s481, 4
        %s483 = smul.addr %s482, 4
        %s484 = scalar_lea.vmem %s3, %s483
        %p485 = pneg %p113
        %p486 = pneg %p110
        %p487 = scmp.lt.s32.totalorder %s29, 1
        %s488 = scalar_select %p487, %s29, 1
        %s489 = smul.addr %s488, 4
        %s490 = smul.addr %s489, 4
        %s491 = scalar_lea.vmem %s4, %s490
        %p492 = pneg %p139
        %p493 = pneg %p136
        %p494 = scmp.lt.s32.totalorder %s29, 1
        %s495 = scalar_select %p494, %s29, 1
        %s496 = smul.addr %s495, 4
        %s497 = smul.addr %s496, 4
        %s498 = scalar_lea.vmem %s5, %s497
        %p499 = pneg %p165
        %p500 = pneg %p162
        %s501 = sand.u32 %s29, 1
        %s502 = scalar_lea.sflag [#allocation6], %s501
        %s503 = sand.u32 %s178, 1
        %s504 = smul.addr %s503, 128
        %s505 = scalar_lea.vmem [#allocation5], %s504
        %p506 = pneg %p191
        %p507 = pneg %p188
        %p508 = scmp.lt.s32.totalorder %s29, 1
        %s509 = scalar_select %p508, %s29, 1
        %s510 = smul.addr %s509, 4
        %s511 = scalar_lea.vmem %s7, %s510
        %p512 = pneg %p217
        %p513 = pneg %p214
        %s514 = sand.u32 %s29, 1
        %s515 = scalar_lea.sflag [#allocation6], %s514
        %s516 = sand.u32 %s230, 1
        %s517 = smul.addr %s516, 2
        %s518 = scalar_lea.vmem [#allocation7], %s517
        %p519 = pneg %p243
        %p520 = pneg %p240
        %p521 = scmp.lt.s32.totalorder %s29, 1
        %s522 = scalar_select %p521, %s29, 1
        %s523 = smul.addr %s522, 8
        %s524 = smul.addr %s523, 4
        %s525 = scalar_lea.vmem %s9, %s524
        %p526 = pneg %p269
        %p527 = pneg %p266
        %p528 = scmp.lt.s32.totalorder %s29, 1
        %s529 = scalar_select %p528, %s29, 1
        %s530 = smul.addr %s529, 3
        %s531 = scalar_lea.vmem %s10, %s530
        %p532 = pneg %p295
        %p533 = pneg %p292
        %p534 = pneg %p321
        %p535 = pneg %p318
        %s536 = sand.u32 %s308, 1
        %s537 = scalar_lea.sflag [#allocation4], %s536
        %s538 = sand.u32 %s308, 1
        %s539 = smul.addr %s538, 8
        %s540 = scalar_lea.vmem [#allocation8], %s539
        %p541 = scmp.lt.s32.totalorder %s29, 1
        %s542 = scalar_select %p541, %s29, 1
        %s543 = smul.addr %s542, 4
        %s544 = smul.addr %s543, 4
        %s545 = scalar_lea.vmem %s3, %s544
        %p546 = scmp.lt.s32.totalorder %s29, 1
        %s547 = scalar_select %p546, %s29, 1
        %s548 = smul.addr %s547, 4
        %s549 = smul.addr %s548, 4
        %s550 = scalar_lea.vmem %s4, %s549
        %p551 = scmp.lt.s32.totalorder %s29, 1
        %s552 = scalar_select %p551, %s29, 1
        %s553 = smul.addr %s552, 4
        %s554 = smul.addr %s553, 4
        %s555 = scalar_lea.vmem %s5, %s554
        %p556 = scmp.lt.s32.totalorder %s29, 1
        %s557 = scalar_select %p556, %s29, 1
        %s558 = smul.addr %s557, 4
        %s559 = scalar_lea.vmem %s7, %s558
        %p560 = scmp.lt.s32.totalorder %s29, 1
        %s561 = scalar_select %p560, %s29, 1
        %s562 = smul.addr %s561, 8
        %s563 = smul.addr %s562, 4
        %s564 = scalar_lea.vmem %s9, %s563
        %p565 = scmp.lt.s32.totalorder %s29, 1
        %s566 = scalar_select %p565, %s29, 1
        %s567 = smul.addr %s566, 3
        %s568 = scalar_lea.vmem %s10, %s567
        %v570 = vld [vmem:[#allocation2] sm:$0xf]
        %v571 = vld [vmem:[%s1] sm:$0xf]
        %v572 = vld [vmem:[%s1 + $0x4] sm:$0xf]
        %v573 = vlaneseq
        %v574 = vand.u32 %v573, 127
        %v575 = vld [vmem:[%s2] sm:$0xff]
        %v576 = vld [vmem:[%s2 + $0x8] sm:$0xff]
        %577 = vset.pattern.permute.xlu0 0
        %578 = vperm.xlu0 %577, %v575
        %v579 = vpop.permute.xlu0 %578
        %580 = vset.pattern.permute.xlu0 0
        %581 = vperm.xlu0 %580, %v576
        %v582 = vpop.permute.xlu0 %581
        %vm583 = vcmp.eq.s32.totalorder %v574, %v579
        %vm584 = vcmp.eq.s32.totalorder %v574, %v582
        %v585 = vsel %vm583, 1, 0
        %v586 = vsel %vm584, 1, 0
        %v587 = vcvt.s32.f32 %v585
        %v588 = vcvt.s32.f32 %v586
        %v589 = vpack.c.bf16 %v588, %v587
        %590 = vset.pattern.permute.xlu0 1
        %591 = vperm.xlu0 %590, %v575
        %v592 = vpop.permute.xlu0 %591
        %593 = vset.pattern.permute.xlu0 1
        %594 = vperm.xlu0 %593, %v576
        %v595 = vpop.permute.xlu0 %594
        %vm596 = vcmp.eq.s32.totalorder %v574, %v592
        %vm597 = vcmp.eq.s32.totalorder %v574, %v595
        %v598 = vsel %vm596, 1, 0
        %v599 = vsel %vm597, 1, 0
        %v600 = vcvt.s32.f32 %v598
        %v601 = vcvt.s32.f32 %v599
        %v602 = vpack.c.bf16 %v601, %v600
        %v603 = vld [vmem:[%s545] sm:$0xf]
        %v604 = vld [vmem:[%s545 + $0x4] sm:$0xf]
        %v605 = vld [vmem:[%s545 + $0x8] sm:$0xf]
        %v606 = vld [vmem:[%s545 + $0xc] sm:$0xf]
        %v611 = vunpack.c.l.b16 %v603
        %v612 = vunpack.c.l.b16 %v604
        %v613 = vunpack.c.l.b16 %v605
        %v614 = vunpack.c.l.b16 %v606
        %v615 = vpack.c.b16 %v612, %v611
        %v616 = vpack.c.b16 %v614, %v613
        %vm619 = vcmask 261120
        %v621 = vsel %vm619, %v570, 0
        %623 = vmatprep.subr.bf16.mxu0 0
        %624 = vmatpush1.bf16.msra.mxu0 %v615
        %625 = vmatprep.subr.bf16.mxu0 0
        %626 = vmatpush1.bf16.msra.mxu0 %v616
        %627 = vmatprep.subr.bf16.mxu0 0
        %628 = vmatpush1.bf16.msra.mxu0 0
        %629 = vmatprep.subr.bf16.mxu0 0
        %630 = vmatpush1.bf16.msra.mxu0 0
        %631 = vmatprep.subr.bf16.mxu0 0
        %632 = vmatpush1.bf16.msra.mxu0 0
        %633 = vmatprep.subr.bf16.mxu0 0
        %634 = vmatpush1.bf16.msra.mxu0 0
        %635 = vmatprep.subr.bf16.mxu0 0
        %636 = vmatpush1.bf16.msra.mxu0 0
        %637 = vmatprep.subr.bf16.mxu0 0
        %638 = vmatpush1.bf16.msra.mxu0 0
        %639 = vmatprep.subr.bf16.mxu0 0
        %640 = vmatpush1.bf16.msra.mxu0 0
        %641 = vmatprep.subr.bf16.mxu0 0
        %642 = vmatpush1.bf16.msra.mxu0 0
        %643 = vmatprep.subr.bf16.mxu0 0
        %644 = vmatpush1.bf16.msra.mxu0 0
        %645 = vmatprep.subr.bf16.mxu0 0
        %646 = vmatpush1.bf16.msra.mxu0 0
        %647 = vmatprep.subr.bf16.mxu0 0
        %648 = vmatpush1.bf16.msra.mxu0 0
        %649 = vmatprep.subr.bf16.mxu0 0
        %650 = vmatpush1.bf16.msra.mxu0 0
        %651 = vmatprep.subr.bf16.mxu0 0
        %652 = vmatpush1.bf16.msra.mxu0 0
        %653 = vmatprep.subr.bf16.mxu0 0
        %654 = vmatpush1.bf16.msra.mxu0 0
        %655 = vmatprep.mubr.bf16.mxu0 0
        %656 = vmatmul.mubr.bf16.gmra.mrb[0].mxu0 %v621
        %v657 = vpop.f32.mrb[0].mxu0
        %v658 = vadd.f32 0.0, %v657
        %v659 = vpop.f32.mrb[0].mxu0
        %v660 = vpop.f32.mrb[0].mxu0
        %v661 = vpop.f32.mrb[0].mxu0
        %662 = vdwg.mxu0
        %v663 = vld [vmem:[%s550] sm:$0xf]
        %v664 = vld [vmem:[%s550 + $0x4] sm:$0xf]
        %v665 = vld [vmem:[%s550 + $0x8] sm:$0xf]
        %v666 = vld [vmem:[%s550 + $0xc] sm:$0xf]
        %v671 = vunpack.c.l.b16 %v663
        %v672 = vunpack.c.l.b16 %v664
        %v673 = vunpack.c.l.b16 %v665
        %v674 = vunpack.c.l.b16 %v666
        %v675 = vpack.c.b16 %v672, %v671
        %v676 = vpack.c.b16 %v674, %v673
        %679 = vmatprep.subr.bf16.mxu0 0
        %680 = vmatpush1.bf16.msra.mxu0 %v675
        %681 = vmatprep.subr.bf16.mxu0 0
        %682 = vmatpush1.bf16.msra.mxu0 %v676
        %683 = vmatprep.subr.bf16.mxu0 0
        %684 = vmatpush1.bf16.msra.mxu0 0
        %685 = vmatprep.subr.bf16.mxu0 0
        %686 = vmatpush1.bf16.msra.mxu0 0
        %687 = vmatprep.subr.bf16.mxu0 0
        %688 = vmatpush1.bf16.msra.mxu0 0
        %689 = vmatprep.subr.bf16.mxu0 0
        %690 = vmatpush1.bf16.msra.mxu0 0
        %691 = vmatprep.subr.bf16.mxu0 0
        %692 = vmatpush1.bf16.msra.mxu0 0
        %693 = vmatprep.subr.bf16.mxu0 0
        %694 = vmatpush1.bf16.msra.mxu0 0
        %695 = vmatprep.subr.bf16.mxu0 0
        %696 = vmatpush1.bf16.msra.mxu0 0
        %697 = vmatprep.subr.bf16.mxu0 0
        %698 = vmatpush1.bf16.msra.mxu0 0
        %699 = vmatprep.subr.bf16.mxu0 0
        %700 = vmatpush1.bf16.msra.mxu0 0
        %701 = vmatprep.subr.bf16.mxu0 0
        %702 = vmatpush1.bf16.msra.mxu0 0
        %703 = vmatprep.subr.bf16.mxu0 0
        %704 = vmatpush1.bf16.msra.mxu0 0
        %705 = vmatprep.subr.bf16.mxu0 0
        %706 = vmatpush1.bf16.msra.mxu0 0
        %707 = vmatprep.subr.bf16.mxu0 0
        %708 = vmatpush1.bf16.msra.mxu0 0
        %709 = vmatprep.subr.bf16.mxu0 0
        %710 = vmatpush1.bf16.msra.mxu0 0
        %711 = vmatprep.mubr.bf16.mxu0 0
        %712 = vmatmul.mubr.bf16.gmra.mrb[0].mxu0 %v621
        %v713 = vpop.f32.mrb[0].mxu0
        %v714 = vadd.f32 0.0, %v713
        %v715 = vpop.f32.mrb[0].mxu0
        %v716 = vpop.f32.mrb[0].mxu0
        %v717 = vpop.f32.mrb[0].mxu0
        %718 = vdwg.mxu0
        %v719 = vld [vmem:[%s555] sm:$0xf]
        %v720 = vld [vmem:[%s555 + $0x4] sm:$0xf]
        %v721 = vld [vmem:[%s555 + $0x8] sm:$0xf]
        %v722 = vld [vmem:[%s555 + $0xc] sm:$0xf]
        %v725 = vunpack.c.l.b16 %v571
        %v726 = vunpack.c.l.b16 %v572
        %v727 = vpack.c.b16 %v726, %v725
        %v732 = vunpack.c.l.b16 %v719
        %v733 = vunpack.c.l.b16 %v720
        %v734 = vunpack.c.l.b16 %v721
        %v735 = vunpack.c.l.b16 %v722
        %v736 = vpack.c.b16 %v733, %v732
        %v737 = vpack.c.b16 %v735, %v734
        %v741 = vsel %vm619, %v727, 0
        %743 = vmatprep.subr.bf16.mxu0 0
        %744 = vmatpush1.bf16.msra.mxu0 %v736
        %745 = vmatprep.subr.bf16.mxu0 0
        %746 = vmatpush1.bf16.msra.mxu0 %v737
        %747 = vmatprep.subr.bf16.mxu0 0
        %748 = vmatpush1.bf16.msra.mxu0 0
        %749 = vmatprep.subr.bf16.mxu0 0
        %750 = vmatpush1.bf16.msra.mxu0 0
        %751 = vmatprep.subr.bf16.mxu0 0
        %752 = vmatpush1.bf16.msra.mxu0 0
        %753 = vmatprep.subr.bf16.mxu0 0
        %754 = vmatpush1.bf16.msra.mxu0 0
        %755 = vmatprep.subr.bf16.mxu0 0
        %756 = vmatpush1.bf16.msra.mxu0 0
        %757 = vmatprep.subr.bf16.mxu0 0
        %758 = vmatpush1.bf16.msra.mxu0 0
        %759 = vmatprep.subr.bf16.mxu0 0
        %760 = vmatpush1.bf16.msra.mxu0 0
        %761 = vmatprep.subr.bf16.mxu0 0
        %762 = vmatpush1.bf16.msra.mxu0 0
        %763 = vmatprep.subr.bf16.mxu0 0
        %764 = vmatpush1.bf16.msra.mxu0 0
        %765 = vmatprep.subr.bf16.mxu0 0
        %766 = vmatpush1.bf16.msra.mxu0 0
        %767 = vmatprep.subr.bf16.mxu0 0
        %768 = vmatpush1.bf16.msra.mxu0 0
        %769 = vmatprep.subr.bf16.mxu0 0
        %770 = vmatpush1.bf16.msra.mxu0 0
        %771 = vmatprep.subr.bf16.mxu0 0
        %772 = vmatpush1.bf16.msra.mxu0 0
        %773 = vmatprep.subr.bf16.mxu0 0
        %774 = vmatpush1.bf16.msra.mxu0 0
        %775 = vmatprep.mubr.bf16.mxu0 0
        %776 = vmatmul.mubr.bf16.gmra.mrb[0].mxu0 %v741
        %v777 = vpop.f32.mrb[0].mxu0
        %v778 = vadd.f32 0.0, %v777
        %v779 = vpop.f32.mrb[0].mxu0
        %v780 = vpop.f32.mrb[0].mxu0
        %v781 = vadd.f32 0.0, %v780
        %v782 = vpop.f32.mrb[0].mxu0
        %783 = vdwg.mxu0
        %v784 = vpack.c.bf16 %v658, %v658
        %vm785 = vcmask 64512
        %v787 = vsel %vm785, %v589, 0
        %vm789 = vcmask 1043456
        %v791 = vsel %vm789, %v784, 0
        %793 = vmatprep.subr.bf16.mxu0 0
        %794 = vmatpush1.bf16.msra.mxu0 %v791
        %795 = vmatprep.subr.bf16.mxu0 0
        %796 = vmatpush1.bf16.msra.mxu0 0
        %797 = vmatprep.subr.bf16.mxu0 0
        %798 = vmatpush1.bf16.msra.mxu0 0
        %799 = vmatprep.subr.bf16.mxu0 0
        %800 = vmatpush1.bf16.msra.mxu0 0
        %801 = vmatprep.subr.bf16.mxu0 0
        %802 = vmatpush1.bf16.msra.mxu0 0
        %803 = vmatprep.subr.bf16.mxu0 0
        %804 = vmatpush1.bf16.msra.mxu0 0
        %805 = vmatprep.subr.bf16.mxu0 0
        %806 = vmatpush1.bf16.msra.mxu0 0
        %807 = vmatprep.subr.bf16.mxu0 0
        %808 = vmatpush1.bf16.msra.mxu0 0
        %809 = vmatprep.subr.bf16.mxu0 0
        %810 = vmatpush1.bf16.msra.mxu0 0
        %811 = vmatprep.subr.bf16.mxu0 0
        %812 = vmatpush1.bf16.msra.mxu0 0
        %813 = vmatprep.subr.bf16.mxu0 0
        %814 = vmatpush1.bf16.msra.mxu0 0
        %815 = vmatprep.subr.bf16.mxu0 0
        %816 = vmatpush1.bf16.msra.mxu0 0
        %817 = vmatprep.subr.bf16.mxu0 0
        %818 = vmatpush1.bf16.msra.mxu0 0
        %819 = vmatprep.subr.bf16.mxu0 0
        %820 = vmatpush1.bf16.msra.mxu0 0
        %821 = vmatprep.subr.bf16.mxu0 0
        %822 = vmatpush1.bf16.msra.mxu0 0
        %823 = vmatprep.subr.bf16.mxu0 0
        %824 = vmatpush1.bf16.msra.mxu0 0
        %825 = vmatprep.mubr.bf16.mxu0 0
        %826 = vmatmul.mubr.bf16.gmra.mrb[0].mxu0 %v787
        %v827 = vpop.f32.mrb[0].mxu0
        %v828 = vadd.f32 0.0, %v827
        %v829 = vpop.f32.mrb[0].mxu0
        %v830 = vpop.f32.mrb[0].mxu0
        %v831 = vadd.f32 0.0, %v830
        %v832 = vpop.f32.mrb[0].mxu0
        %833 = vdwg.mxu0
        %v834 = vpack.c.bf16 %v714, %v714
        %v836 = vsel %vm785, %v602, 0
        %v839 = vsel %vm789, %v834, 0
        %841 = vmatprep.subr.bf16.mxu0 0
        %842 = vmatpush1.bf16.msra.mxu0 %v839
        %843 = vmatprep.subr.bf16.mxu0 0
        %844 = vmatpush1.bf16.msra.mxu0 0
        %845 = vmatprep.subr.bf16.mxu0 0
        %846 = vmatpush1.bf16.msra.mxu0 0
        %847 = vmatprep.subr.bf16.mxu0 0
        %848 = vmatpush1.bf16.msra.mxu0 0
        %849 = vmatprep.subr.bf16.mxu0 0
        %850 = vmatpush1.bf16.msra.mxu0 0
        %851 = vmatprep.subr.bf16.mxu0 0
        %852 = vmatpush1.bf16.msra.mxu0 0
        %853 = vmatprep.subr.bf16.mxu0 0
        %854 = vmatpush1.bf16.msra.mxu0 0
        %855 = vmatprep.subr.bf16.mxu0 0
        %856 = vmatpush1.bf16.msra.mxu0 0
        %857 = vmatprep.subr.bf16.mxu0 0
        %858 = vmatpush1.bf16.msra.mxu0 0
        %859 = vmatprep.subr.bf16.mxu0 0
        %860 = vmatpush1.bf16.msra.mxu0 0
        %861 = vmatprep.subr.bf16.mxu0 0
        %862 = vmatpush1.bf16.msra.mxu0 0
        %863 = vmatprep.subr.bf16.mxu0 0
        %864 = vmatpush1.bf16.msra.mxu0 0
        %865 = vmatprep.subr.bf16.mxu0 0
        %866 = vmatpush1.bf16.msra.mxu0 0
        %867 = vmatprep.subr.bf16.mxu0 0
        %868 = vmatpush1.bf16.msra.mxu0 0
        %869 = vmatprep.subr.bf16.mxu0 0
        %870 = vmatpush1.bf16.msra.mxu0 0
        %871 = vmatprep.subr.bf16.mxu0 0
        %872 = vmatpush1.bf16.msra.mxu0 0
        %873 = vmatprep.mubr.bf16.mxu0 0
        %874 = vmatmul.mubr.bf16.gmra.mrb[0].mxu0 %v836
        %v875 = vpop.f32.mrb[0].mxu0
        %v876 = vadd.f32 0.0, %v875
        %v877 = vpop.f32.mrb[0].mxu0
        %v878 = vpop.f32.mrb[0].mxu0
        %v879 = vadd.f32 0.0, %v878
        %v880 = vpop.f32.mrb[0].mxu0
        %881 = vdwg.mxu0
        %884 = vrot.lane.b32.xlu0 %v778, 32
        %v885 = vpop.permute.xlu0 %884
        %886 = vrot.lane.b32.xlu0 %v781, 32
        %v887 = vpop.permute.xlu0 %886
        %v890 = vsel %vm619, %v828, %v885
        %v891 = vsel %vm619, %v831, %v887
        %v892 = vpack.c.bf16 %v891, %v890
        %895 = vrot.lane.b32.xlu0 %v828, 96
        %v896 = vpop.permute.xlu0 %895
        %897 = vrot.lane.b32.xlu0 %v831, 96
        %v898 = vpop.permute.xlu0 %897
        %v901 = vsel %vm619, %v896, %v778
        %v902 = vsel %vm619, %v898, %v781
        %v903 = vpack.c.bf16 %v902, %v901
        %v904 = vld [vmem:[%s460] sm:$0xf]
        %v905 = vld [vmem:[%s460 + $0x4] sm:$0xf]
        %v906 = vld [vmem:[%s460 + $0x8] sm:$0xf]
        %v907 = vld [vmem:[%s460 + $0xc] sm:$0xf]
        %v908 = vld [vmem:[%s460 + $0x10] sm:$0xf]
        %v909 = vld [vmem:[%s460 + $0x14] sm:$0xf]
        %v910 = vld [vmem:[%s460 + $0x18] sm:$0xf]
        %v911 = vld [vmem:[%s460 + $0x1c] sm:$0xf]
        %v912 = vld [vmem:[%s559] sm:$0x1]
        %v914 = vlaneseq
        %v915 = vshrl.u32 %v914, 7
        %v916 = vsub.s32 0, %v915
        %v917 = vrot.slane %v912, %v916
        %v927 = vunpack.c.l.b16 %v904
        %v928 = vunpack.c.l.b16 %v905
        %v929 = vunpack.c.l.b16 %v906
        %v930 = vunpack.c.l.b16 %v907
        %v931 = vunpack.c.l.b16 %v908
        %v932 = vunpack.c.l.b16 %v909
        %v933 = vunpack.c.l.b16 %v910
        %v934 = vunpack.c.l.b16 %v911
        %v935 = vpack.c.b16 %v928, %v927
        %v936 = vpack.c.b16 %v930, %v929
        %v937 = vpack.c.b16 %v932, %v931
        %v938 = vpack.c.b16 %v934, %v933
        %vm943 = vcmask 523264
        %v945 = vsel %vm943, %v892, 0
        %947 = vmatprep.subr.bf16.mxu0 0
        %948 = vmatpush1.bf16.msra.mxu0 %v935
        %949 = vmatprep.subr.bf16.mxu0 0
        %950 = vmatpush1.bf16.msra.mxu0 %v936
        %951 = vmatprep.subr.bf16.mxu0 0
        %952 = vmatpush1.bf16.msra.mxu0 %v937
        %953 = vmatprep.subr.bf16.mxu0 0
        %954 = vmatpush1.bf16.msra.mxu0 %v938
        %955 = vmatprep.subr.bf16.mxu0 0
        %956 = vmatpush1.bf16.msra.mxu0 0
        %957 = vmatprep.subr.bf16.mxu0 0
        %958 = vmatpush1.bf16.msra.mxu0 0
        %959 = vmatprep.subr.bf16.mxu0 0
        %960 = vmatpush1.bf16.msra.mxu0 0
        %961 = vmatprep.subr.bf16.mxu0 0
        %962 = vmatpush1.bf16.msra.mxu0 0
        %963 = vmatprep.subr.bf16.mxu0 0
        %964 = vmatpush1.bf16.msra.mxu0 0
        %965 = vmatprep.subr.bf16.mxu0 0
        %966 = vmatpush1.bf16.msra.mxu0 0
        %967 = vmatprep.subr.bf16.mxu0 0
        %968 = vmatpush1.bf16.msra.mxu0 0
        %969 = vmatprep.subr.bf16.mxu0 0
        %970 = vmatpush1.bf16.msra.mxu0 0
        %971 = vmatprep.subr.bf16.mxu0 0
        %972 = vmatpush1.bf16.msra.mxu0 0
        %973 = vmatprep.subr.bf16.mxu0 0
        %974 = vmatpush1.bf16.msra.mxu0 0
        %975 = vmatprep.subr.bf16.mxu0 0
        %976 = vmatpush1.bf16.msra.mxu0 0
        %977 = vmatprep.subr.bf16.mxu0 0
        %978 = vmatpush1.bf16.msra.mxu0 0
        %979 = vmatprep.mubr.bf16.mxu0 0
        %980 = vmatmul.mubr.bf16.gmra.mrb[0].mxu0 %v945
        %v981 = vpop.f32.mrb[0].mxu0
        %v982 = vadd.f32 %v917, %v981
        %v983 = vpop.f32.mrb[0].mxu0
        %v984 = vpop.f32.mrb[0].mxu0
        %v985 = vadd.f32 %v917, %v984
        %v986 = vpop.f32.mrb[0].mxu0
        %987 = vdwg.mxu0
        %v988 = vand.u32 2147483647, %v982
        %v989 = vand.u32 2147483647, %v985
        %v990 = vsub.f32 0.0, %v988
        %v991 = vsub.f32 0.0, %v989
        %v992 = vmul.f32 %v990, 1.442695
        %v993 = vpow.pop %v992
        %v994 = vmul.f32 %v991, 1.442695
        %v995 = vpow.pop %v994
        %vm996 = vcmp.ge.f32.partialorder %v982, 0.0
        %vm997 = vcmp.ge.f32.partialorder %v985, 0.0
        %v998 = vadd.f32 %v993, 1.0
        %v999 = vadd.f32 %v995, 1.0
        %v1000 = vrcp.pop %v998
        %v1001 = vmul.f32 1.0, %v1000
        %v1002 = vrcp.pop %v999
        %v1003 = vmul.f32 1.0, %v1002
        %v1004 = vmul.f32 %v993, %v1000
        %v1005 = vmul.f32 %v995, %v1002
        %v1006 = vsel %vm996, %v1001, %v1004
        %v1007 = vsel %vm997, %v1003, %v1005
        %v1008 = vmul.f32 %v982, %v1006
        %v1009 = vmul.f32 %v985, %v1007
        %v1010 = vpack.c.bf16 %v1009, %v1008
        %s1011 = scalar_lea.vmem %s460, 32 [#allocation5]
        %v1012 = vld [vmem:[%s1011] sm:$0xf]
        %v1013 = vld [vmem:[%s1011 + $0x4] sm:$0xf]
        %v1014 = vld [vmem:[%s1011 + $0x8] sm:$0xf]
        %v1015 = vld [vmem:[%s1011 + $0xc] sm:$0xf]
        %v1016 = vld [vmem:[%s1011 + $0x10] sm:$0xf]
        %v1017 = vld [vmem:[%s1011 + $0x14] sm:$0xf]
        %v1018 = vld [vmem:[%s1011 + $0x18] sm:$0xf]
        %v1019 = vld [vmem:[%s1011 + $0x1c] sm:$0xf]
        %s1020 = scalar_lea.vmem %s559, 1
        %v1021 = vld [vmem:[%s1020] sm:$0x1]
        %v1023 = vlaneseq
        %v1024 = vshrl.u32 %v1023, 7
        %v1025 = vsub.s32 0, %v1024
        %v1026 = vrot.slane %v1021, %v1025
        %v1036 = vunpack.c.l.b16 %v1012
        %v1037 = vunpack.c.l.b16 %v1013
        %v1038 = vunpack.c.l.b16 %v1014
        %v1039 = vunpack.c.l.b16 %v1015
        %v1040 = vunpack.c.l.b16 %v1016
        %v1041 = vunpack.c.l.b16 %v1017
        %v1042 = vunpack.c.l.b16 %v1018
        %v1043 = vunpack.c.l.b16 %v1019
        %v1044 = vpack.c.b16 %v1037, %v1036
        %v1045 = vpack.c.b16 %v1039, %v1038
        %v1046 = vpack.c.b16 %v1041, %v1040
        %v1047 = vpack.c.b16 %v1043, %v1042
        %v1053 = vsel %vm943, %v1010, 0
        %1055 = vmatprep.subr.bf16.mxu0 0
        %1056 = vmatpush1.bf16.msra.mxu0 %v1044
        %1057 = vmatprep.subr.bf16.mxu0 0
        %1058 = vmatpush1.bf16.msra.mxu0 %v1045
        %1059 = vmatprep.subr.bf16.mxu0 0
        %1060 = vmatpush1.bf16.msra.mxu0 %v1046
        %1061 = vmatprep.subr.bf16.mxu0 0
        %1062 = vmatpush1.bf16.msra.mxu0 %v1047
        %1063 = vmatprep.subr.bf16.mxu0 0
        %1064 = vmatpush1.bf16.msra.mxu0 0
        %1065 = vmatprep.subr.bf16.mxu0 0
        %1066 = vmatpush1.bf16.msra.mxu0 0
        %1067 = vmatprep.subr.bf16.mxu0 0
        %1068 = vmatpush1.bf16.msra.mxu0 0
        %1069 = vmatprep.subr.bf16.mxu0 0
        %1070 = vmatpush1.bf16.msra.mxu0 0
        %1071 = vmatprep.subr.bf16.mxu0 0
        %1072 = vmatpush1.bf16.msra.mxu0 0
        %1073 = vmatprep.subr.bf16.mxu0 0
        %1074 = vmatpush1.bf16.msra.mxu0 0
        %1075 = vmatprep.subr.bf16.mxu0 0
        %1076 = vmatpush1.bf16.msra.mxu0 0
        %1077 = vmatprep.subr.bf16.mxu0 0
        %1078 = vmatpush1.bf16.msra.mxu0 0
        %1079 = vmatprep.subr.bf16.mxu0 0
        %1080 = vmatpush1.bf16.msra.mxu0 0
        %1081 = vmatprep.subr.bf16.mxu0 0
        %1082 = vmatpush1.bf16.msra.mxu0 0
        %1083 = vmatprep.subr.bf16.mxu0 0
        %1084 = vmatpush1.bf16.msra.mxu0 0
        %1085 = vmatprep.subr.bf16.mxu0 0
        %1086 = vmatpush1.bf16.msra.mxu0 0
        %1087 = vmatprep.mubr.bf16.mxu0 0
        %1088 = vmatmul.mubr.bf16.gmra.mrb[0].mxu0 %v1053
        %v1089 = vpop.f32.mrb[0].mxu0
        %v1090 = vadd.f32 %v1026, %v1089
        %v1091 = vpop.f32.mrb[0].mxu0
        %v1092 = vpop.f32.mrb[0].mxu0
        %v1093 = vadd.f32 %v1026, %v1092
        %v1094 = vpop.f32.mrb[0].mxu0
        %1095 = vdwg.mxu0
        %1098 = vrot.lane.b32.xlu0 %v876, 32
        %v1099 = vpop.permute.xlu0 %1098
        %1100 = vrot.lane.b32.xlu0 %v879, 32
        %v1101 = vpop.permute.xlu0 %1100
        %v1104 = vsel %vm619, %v876, %v1099
        %v1105 = vsel %vm619, %v879, %v1101
        %v1106 = vmul.f32 %v1104, %v1090
        %v1107 = vmul.f32 %v1105, %v1093
        %v1108 = vmul.f32 %v1106, 0.125
        %v1109 = vmul.f32 %v1107, 0.125
        %s1110 = scalar_lea.vmem %s460, 64 [#allocation5]
        %v1111 = vld [vmem:[%s1110] sm:$0xf]
        %v1112 = vld [vmem:[%s1110 + $0x4] sm:$0xf]
        %v1113 = vld [vmem:[%s1110 + $0x8] sm:$0xf]
        %v1114 = vld [vmem:[%s1110 + $0xc] sm:$0xf]
        %v1115 = vld [vmem:[%s1110 + $0x10] sm:$0xf]
        %v1116 = vld [vmem:[%s1110 + $0x14] sm:$0xf]
        %v1117 = vld [vmem:[%s1110 + $0x18] sm:$0xf]
        %v1118 = vld [vmem:[%s1110 + $0x1c] sm:$0xf]
        %s1119 = scalar_lea.vmem %s559, 2
        %v1120 = vld [vmem:[%s1119] sm:$0x1]
        %v1122 = vlaneseq
        %v1123 = vshrl.u32 %v1122, 7
        %v1124 = vsub.s32 0, %v1123
        %v1125 = vrot.slane %v1120, %v1124
        %v1135 = vunpack.c.l.b16 %v1111
        %v1136 = vunpack.c.l.b16 %v1112
        %v1137 = vunpack.c.l.b16 %v1113
        %v1138 = vunpack.c.l.b16 %v1114
        %v1139 = vunpack.c.l.b16 %v1115
        %v1140 = vunpack.c.l.b16 %v1116
        %v1141 = vunpack.c.l.b16 %v1117
        %v1142 = vunpack.c.l.b16 %v1118
        %v1143 = vpack.c.b16 %v1136, %v1135
        %v1144 = vpack.c.b16 %v1138, %v1137
        %v1145 = vpack.c.b16 %v1140, %v1139
        %v1146 = vpack.c.b16 %v1142, %v1141
        %v1152 = vsel %vm943, %v903, 0
        %1154 = vmatprep.subr.bf16.mxu0 0
        %1155 = vmatpush1.bf16.msra.mxu0 %v1143
        %1156 = vmatprep.subr.bf16.mxu0 0
        %1157 = vmatpush1.bf16.msra.mxu0 %v1144
        %1158 = vmatprep.subr.bf16.mxu0 0
        %1159 = vmatpush1.bf16.msra.mxu0 %v1145
        %1160 = vmatprep.subr.bf16.mxu0 0
        %1161 = vmatpush1.bf16.msra.mxu0 %v1146
        %1162 = vmatprep.subr.bf16.mxu0 0
        %1163 = vmatpush1.bf16.msra.mxu0 0
        %1164 = vmatprep.subr.bf16.mxu0 0
        %1165 = vmatpush1.bf16.msra.mxu0 0
        %1166 = vmatprep.subr.bf16.mxu0 0
        %1167 = vmatpush1.bf16.msra.mxu0 0
        %1168 = vmatprep.subr.bf16.mxu0 0
        %1169 = vmatpush1.bf16.msra.mxu0 0
        %1170 = vmatprep.subr.bf16.mxu0 0
        %1171 = vmatpush1.bf16.msra.mxu0 0
        %1172 = vmatprep.subr.bf16.mxu0 0
        %1173 = vmatpush1.bf16.msra.mxu0 0
        %1174 = vmatprep.subr.bf16.mxu0 0
        %1175 = vmatpush1.bf16.msra.mxu0 0
        %1176 = vmatprep.subr.bf16.mxu0 0
        %1177 = vmatpush1.bf16.msra.mxu0 0
        %1178 = vmatprep.subr.bf16.mxu0 0
        %1179 = vmatpush1.bf16.msra.mxu0 0
        %1180 = vmatprep.subr.bf16.mxu0 0
        %1181 = vmatpush1.bf16.msra.mxu0 0
        %1182 = vmatprep.subr.bf16.mxu0 0
        %1183 = vmatpush1.bf16.msra.mxu0 0
        %1184 = vmatprep.subr.bf16.mxu0 0
        %1185 = vmatpush1.bf16.msra.mxu0 0
        %1186 = vmatprep.mubr.bf16.mxu0 0
        %1187 = vmatmul.mubr.bf16.gmra.mrb[0].mxu0 %v1152
        %v1188 = vpop.f32.mrb[0].mxu0
        %v1189 = vadd.f32 %v1125, %v1188
        %v1190 = vpop.f32.mrb[0].mxu0
        %v1191 = vpop.f32.mrb[0].mxu0
        %v1192 = vadd.f32 %v1125, %v1191
        %v1193 = vpop.f32.mrb[0].mxu0
        %1194 = vdwg.mxu0
        %v1195 = vand.u32 2147483647, %v1189
        %v1196 = vand.u32 2147483647, %v1192
        %v1197 = vsub.f32 0.0, %v1195
        %v1198 = vsub.f32 0.0, %v1196
        %v1199 = vmul.f32 %v1197, 1.442695
        %v1200 = vpow.pop %v1199
        %v1201 = vmul.f32 %v1198, 1.442695
        %v1202 = vpow.pop %v1201
        %vm1203 = vcmp.ge.f32.partialorder %v1189, 0.0
        %vm1204 = vcmp.ge.f32.partialorder %v1192, 0.0
        %v1205 = vadd.f32 %v1200, 1.0
        %v1206 = vadd.f32 %v1202, 1.0
        %v1207 = vrcp.pop %v1205
        %v1208 = vmul.f32 1.0, %v1207
        %v1209 = vrcp.pop %v1206
        %v1210 = vmul.f32 1.0, %v1209
        %v1211 = vmul.f32 %v1200, %v1207
        %v1212 = vmul.f32 %v1202, %v1209
        %v1213 = vsel %vm1203, %v1208, %v1211
        %v1214 = vsel %vm1204, %v1210, %v1212
        %v1215 = vmul.f32 %v1189, %v1213
        %v1216 = vmul.f32 %v1192, %v1214
        %v1217 = vpack.c.bf16 %v1216, %v1215
        %s1218 = scalar_lea.vmem %s460, 96 [#allocation5]
        %v1219 = vld [vmem:[%s1218] sm:$0xf]
        %v1220 = vld [vmem:[%s1218 + $0x4] sm:$0xf]
        %v1221 = vld [vmem:[%s1218 + $0x8] sm:$0xf]
        %v1222 = vld [vmem:[%s1218 + $0xc] sm:$0xf]
        %v1223 = vld [vmem:[%s1218 + $0x10] sm:$0xf]
        %v1224 = vld [vmem:[%s1218 + $0x14] sm:$0xf]
        %v1225 = vld [vmem:[%s1218 + $0x18] sm:$0xf]
        %v1226 = vld [vmem:[%s1218 + $0x1c] sm:$0xf]
        %s1227 = scalar_lea.vmem %s559, 3
        %v1228 = vld [vmem:[%s1227] sm:$0x1]
        %v1230 = vlaneseq
        %v1231 = vshrl.u32 %v1230, 7
        %v1232 = vsub.s32 0, %v1231
        %v1233 = vrot.slane %v1228, %v1232
        %v1243 = vunpack.c.l.b16 %v1219
        %v1244 = vunpack.c.l.b16 %v1220
        %v1245 = vunpack.c.l.b16 %v1221
        %v1246 = vunpack.c.l.b16 %v1222
        %v1247 = vunpack.c.l.b16 %v1223
        %v1248 = vunpack.c.l.b16 %v1224
        %v1249 = vunpack.c.l.b16 %v1225
        %v1250 = vunpack.c.l.b16 %v1226
        %v1251 = vpack.c.b16 %v1244, %v1243
        %v1252 = vpack.c.b16 %v1246, %v1245
        %v1253 = vpack.c.b16 %v1248, %v1247
        %v1254 = vpack.c.b16 %v1250, %v1249
        %v1260 = vsel %vm943, %v1217, 0
        %1262 = vmatprep.subr.bf16.mxu0 0
        %1263 = vmatpush1.bf16.msra.mxu0 %v1251
        %1264 = vmatprep.subr.bf16.mxu0 0
        %1265 = vmatpush1.bf16.msra.mxu0 %v1252
        %1266 = vmatprep.subr.bf16.mxu0 0
        %1267 = vmatpush1.bf16.msra.mxu0 %v1253
        %1268 = vmatprep.subr.bf16.mxu0 0
        %1269 = vmatpush1.bf16.msra.mxu0 %v1254
        %1270 = vmatprep.subr.bf16.mxu0 0
        %1271 = vmatpush1.bf16.msra.mxu0 0
        %1272 = vmatprep.subr.bf16.mxu0 0
        %1273 = vmatpush1.bf16.msra.mxu0 0
        %1274 = vmatprep.subr.bf16.mxu0 0
        %1275 = vmatpush1.bf16.msra.mxu0 0
        %1276 = vmatprep.subr.bf16.mxu0 0
        %1277 = vmatpush1.bf16.msra.mxu0 0
        %1278 = vmatprep.subr.bf16.mxu0 0
        %1279 = vmatpush1.bf16.msra.mxu0 0
        %1280 = vmatprep.subr.bf16.mxu0 0
        %1281 = vmatpush1.bf16.msra.mxu0 0
        %1282 = vmatprep.subr.bf16.mxu0 0
        %1283 = vmatpush1.bf16.msra.mxu0 0
        %1284 = vmatprep.subr.bf16.mxu0 0
        %1285 = vmatpush1.bf16.msra.mxu0 0
        %1286 = vmatprep.subr.bf16.mxu0 0
        %1287 = vmatpush1.bf16.msra.mxu0 0
        %1288 = vmatprep.subr.bf16.mxu0 0
        %1289 = vmatpush1.bf16.msra.mxu0 0
        %1290 = vmatprep.subr.bf16.mxu0 0
        %1291 = vmatpush1.bf16.msra.mxu0 0
        %1292 = vmatprep.subr.bf16.mxu0 0
        %1293 = vmatpush1.bf16.msra.mxu0 0
        %1294 = vmatprep.mubr.bf16.mxu0 0
        %1295 = vmatmul.mubr.bf16.gmra.mrb[0].mxu0 %v1260
        %v1296 = vpop.f32.mrb[0].mxu0
        %v1297 = vadd.f32 %v1233, %v1296
        %v1298 = vpop.f32.mrb[0].mxu0
        %v1299 = vpop.f32.mrb[0].mxu0
        %v1300 = vadd.f32 %v1233, %v1299
        %v1301 = vpop.f32.mrb[0].mxu0
        %1302 = vdwg.mxu0
        %v1303 = vsel %vm943, %v1108, 0.0
        %v1304 = vsel %vm943, %v1109, 0.0
        %v1305 = vadd.f32 %v1303, %v1304
        %v1306 = vrot.slane %v1305, 4
        %v1307 = vadd.f32 %v1305, %v1306
        %v1308 = vrot.slane %v1307, 2
        %v1309 = vadd.f32 %v1307, %v1308
        %v1310 = vrot.slane %v1309, 1
        %v1311 = vadd.f32 %v1309, %v1310
        %v1312 = vrcp.pop 16.0
        %v1313 = vmul.f32 %v1311, %v1312
        %v1314 = vsub.f32 %v1108, %v1313
        %v1315 = vsub.f32 %v1109, %v1313
        %v1316 = vmul.f32 %v1314, %v1314
        %v1317 = vmul.f32 %v1315, %v1315
        %v1318 = vsel %vm943, %v1316, 0.0
        %v1319 = vsel %vm943, %v1317, 0.0
        %v1320 = vadd.f32 %v1318, %v1319
        %v1321 = vrot.slane %v1320, 4
        %v1322 = vadd.f32 %v1320, %v1321
        %v1323 = vrot.slane %v1322, 2
        %v1324 = vadd.f32 %v1322, %v1323
        %v1325 = vrot.slane %v1324, 1
        %v1326 = vadd.f32 %v1324, %v1325
        %v1327 = vmul.f32 %v1326, %v1312
        %v1328 = vadd.f32 %v1327, 1e-05
        %v1329 = vrsqrt.pop %v1328
        %v1330 = vmul.f32 %v1314, %v1329
        %v1331 = vmul.f32 %v1315, %v1329
        %v1332 = vld [vmem:[%s469] sm:$0x1]
        %v1334 = vlaneseq
        %v1335 = vshrl.u32 %v1334, 7
        %v1336 = vsub.s32 0, %v1335
        %v1337 = vrot.slane %v1332, %v1336
        %v1339 = vmul.f32 %v1330, %v1337
        %v1340 = vmul.f32 %v1331, %v1337
        %s1341 = scalar_lea.vmem %s469, 1 [#allocation7]
        %v1342 = vld [vmem:[%s1341] sm:$0x1]
        %v1344 = vlaneseq
        %v1345 = vshrl.u32 %v1344, 7
        %v1346 = vsub.s32 0, %v1345
        %v1347 = vrot.slane %v1342, %v1346
        %v1349 = vadd.f32 %v1339, %v1347
        %v1350 = vadd.f32 %v1340, %v1347
        %v1351 = vand.u32 2147483647, %v1349
        %v1352 = vand.u32 2147483647, %v1350
        %v1353 = vsub.f32 0.0, %v1351
        %v1354 = vsub.f32 0.0, %v1352
        %v1355 = vmul.f32 %v1353, 1.442695
        %v1356 = vpow.pop %v1355
        %v1357 = vmul.f32 %v1354, 1.442695
        %v1358 = vpow.pop %v1357
        %vm1359 = vcmp.ge.f32.partialorder %v1349, 0.0
        %vm1360 = vcmp.ge.f32.partialorder %v1350, 0.0
        %v1361 = vadd.f32 %v1356, 1.0
        %v1362 = vadd.f32 %v1358, 1.0
        %v1363 = vrcp.pop %v1361
        %v1364 = vmul.f32 1.0, %v1363
        %v1365 = vrcp.pop %v1362
        %v1366 = vmul.f32 1.0, %v1365
        %v1367 = vmul.f32 %v1356, %v1363
        %v1368 = vmul.f32 %v1358, %v1365
        %v1369 = vsel %vm1359, %v1364, %v1367
        %v1370 = vsel %vm1360, %v1366, %v1368
        %v1371 = vmul.f32 %v1297, %v1369
        %v1372 = vmul.f32 %v1300, %v1370
        %v1373 = vpack.c.bf16 %v1372, %v1371
        %v1374 = vld [vmem:[%s564] sm:$0xf]
        %v1375 = vld [vmem:[%s564 + $0x4] sm:$0xf]
        %v1376 = vld [vmem:[%s564 + $0x8] sm:$0xf]
        %v1377 = vld [vmem:[%s564 + $0xc] sm:$0xf]
        %v1378 = vld [vmem:[%s564 + $0x10] sm:$0xf]
        %v1379 = vld [vmem:[%s564 + $0x14] sm:$0xf]
        %v1380 = vld [vmem:[%s564 + $0x18] sm:$0xf]
        %v1381 = vld [vmem:[%s564 + $0x1c] sm:$0xf]
        %v1382 = vld [vmem:[%s568] sm:$0x1]
        %v1384 = vlaneseq
        %v1385 = vshrl.u32 %v1384, 7
        %v1386 = vsub.s32 0, %v1385
        %v1387 = vrot.slane %v1382, %v1386
        %v1397 = vunpack.c.l.b16 %v1374
        %v1398 = vunpack.c.l.b16 %v1375
        %v1399 = vunpack.c.l.b16 %v1376
        %v1400 = vunpack.c.l.b16 %v1377
        %v1401 = vunpack.c.l.b16 %v1378
        %v1402 = vunpack.c.l.b16 %v1379
        %v1403 = vunpack.c.l.b16 %v1380
        %v1404 = vunpack.c.l.b16 %v1381
        %v1405 = vpack.c.b16 %v1398, %v1397
        %v1406 = vpack.c.b16 %v1400, %v1399
        %v1407 = vpack.c.b16 %v1402, %v1401
        %v1408 = vpack.c.b16 %v1404, %v1403
        %v1414 = vsel %vm943, %v1373, 0
        %1416 = vmatprep.subr.bf16.mxu0 0
        %1417 = vmatpush1.bf16.msra.mxu0 %v1405
        %1418 = vmatprep.subr.bf16.mxu0 0
        %1419 = vmatpush1.bf16.msra.mxu0 %v1406
        %1420 = vmatprep.subr.bf16.mxu0 0
        %1421 = vmatpush1.bf16.msra.mxu0 %v1407
        %1422 = vmatprep.subr.bf16.mxu0 0
        %1423 = vmatpush1.bf16.msra.mxu0 %v1408
        %1424 = vmatprep.subr.bf16.mxu0 0
        %1425 = vmatpush1.bf16.msra.mxu0 0
        %1426 = vmatprep.subr.bf16.mxu0 0
        %1427 = vmatpush1.bf16.msra.mxu0 0
        %1428 = vmatprep.subr.bf16.mxu0 0
        %1429 = vmatpush1.bf16.msra.mxu0 0
        %1430 = vmatprep.subr.bf16.mxu0 0
        %1431 = vmatpush1.bf16.msra.mxu0 0
        %1432 = vmatprep.subr.bf16.mxu0 0
        %1433 = vmatpush1.bf16.msra.mxu0 0
        %1434 = vmatprep.subr.bf16.mxu0 0
        %1435 = vmatpush1.bf16.msra.mxu0 0
        %1436 = vmatprep.subr.bf16.mxu0 0
        %1437 = vmatpush1.bf16.msra.mxu0 0
        %1438 = vmatprep.subr.bf16.mxu0 0
        %1439 = vmatpush1.bf16.msra.mxu0 0
        %1440 = vmatprep.subr.bf16.mxu0 0
        %1441 = vmatpush1.bf16.msra.mxu0 0
        %1442 = vmatprep.subr.bf16.mxu0 0
        %1443 = vmatpush1.bf16.msra.mxu0 0
        %1444 = vmatprep.subr.bf16.mxu0 0
        %1445 = vmatpush1.bf16.msra.mxu0 0
        %1446 = vmatprep.subr.bf16.mxu0 0
        %1447 = vmatpush1.bf16.msra.mxu0 0
        %1448 = vmatprep.mubr.bf16.mxu0 0
        %1449 = vmatmul.mubr.bf16.gmra.mrb[0].mxu0 %v1414
        %v1450 = vpop.f32.mrb[0].mxu0
        %v1451 = vadd.f32 %v1387, %v1450
        %v1452 = vpop.f32.mrb[0].mxu0
        %v1453 = vpop.f32.mrb[0].mxu0
        %v1454 = vadd.f32 %v1387, %v1453
        %v1455 = vpop.f32.mrb[0].mxu0
        %1456 = vdwg.mxu0
        %v1457 = vsel %vm619, %v1451, 0.0
        %1458 = vadd.xlane.f32.xlu0 %v1457
        %v1459 = vpop.xlane.xlu0 %1458
        %v1460 = vsel %vm619, %v1454, 0.0
        %1461 = vadd.xlane.f32.xlu0 %v1460
        %v1462 = vpop.xlane.xlu0 %1461
        %v1463 = vrcp.pop 32.0
        %v1464 = vmul.f32 %v1459, %v1463
        %v1465 = vmul.f32 %v1462, %v1463
        %v1466 = vsub.f32 %v1451, %v1464
        %v1467 = vsub.f32 %v1454, %v1465
        %v1468 = vmul.f32 %v1466, %v1466
        %v1469 = vmul.f32 %v1467, %v1467
        %v1470 = vsel %vm619, %v1468, 0.0
        %1471 = vadd.xlane.f32.xlu0 %v1470
        %v1472 = vpop.xlane.xlu0 %1471
        %v1473 = vsel %vm619, %v1469, 0.0
        %1474 = vadd.xlane.f32.xlu0 %v1473
        %v1475 = vpop.xlane.xlu0 %1474
        %v1476 = vmul.f32 %v1472, %v1463
        %v1477 = vmul.f32 %v1475, %v1463
        %v1478 = vadd.f32 %v1476, 1e-05
        %v1479 = vadd.f32 %v1477, 1e-05
        %v1480 = vrsqrt.pop %v1478
        %v1481 = vrsqrt.pop %v1479
        %v1482 = vmul.f32 %v1466, %v1480
        %v1483 = vmul.f32 %v1467, %v1481
        %s1484 = scalar_lea.vmem %s568, 1
        %v1485 = vld [vmem:[%s1484] sm:$0x1]
        %v1487 = vlaneseq
        %v1488 = vshrl.u32 %v1487, 7
        %v1489 = vsub.s32 0, %v1488
        %v1490 = vrot.slane %v1485, %v1489
        %v1492 = vmul.f32 %v1482, %v1490
        %v1493 = vmul.f32 %v1483, %v1490
        %s1494 = scalar_lea.vmem %s568, 2
        %v1495 = vld [vmem:[%s1494] sm:$0x1]
        %v1497 = vlaneseq
        %v1498 = vshrl.u32 %v1497, 7
        %v1499 = vsub.s32 0, %v1498
        %v1500 = vrot.slane %v1495, %v1499
        %v1502 = vadd.f32 %v1492, %v1500
        %v1503 = vadd.f32 %v1493, %v1500
        %v1504 = vand.u32 2147483647, %v1502
        %v1505 = vand.u32 2147483647, %v1503
        %v1506 = vsub.f32 0.0, %v1504
        %v1507 = vsub.f32 0.0, %v1505
        %v1508 = vmul.f32 %v1506, 1.442695
        %v1509 = vpow.pop %v1508
        %v1510 = vmul.f32 %v1507, 1.442695
        %v1511 = vpow.pop %v1510
        %vm1512 = vcmp.ge.f32.partialorder %v1502, 0.0
        %vm1513 = vcmp.ge.f32.partialorder %v1503, 0.0
        %v1514 = vadd.f32 %v1509, 1.0
        %v1515 = vadd.f32 %v1511, 1.0
        %v1516 = vrcp.pop %v1514
        %v1517 = vmul.f32 1.0, %v1516
        %v1518 = vrcp.pop %v1515
        %v1519 = vmul.f32 1.0, %v1518
        %v1520 = vmul.f32 %v1509, %v1516
        %v1521 = vmul.f32 %v1511, %v1518
        %v1522 = vsel %vm1512, %v1517, %v1520
        %v1523 = vsel %vm1513, %v1519, %v1521
        %v1524 = vmul.f32 %v1502, %v1522
        %v1525 = vmul.f32 %v1503, %v1523
        %v1526 = vpack.c.bf16 %v1525, %v1524
        %1527 = vxpose.xlu0.c.b16.start [1/8] %v602, 128
        %1528 = vxpose.xlu0.c.b16.cont [2/8] 0, 128
        %1529 = vxpose.xlu0.c.b16.cont [3/8] 0, 128
        %1530 = vxpose.xlu0.c.b16.cont [4/8] 0, 128
        %1531 = vxpose.xlu0.c.b16.cont [5/8] 0, 128
        %1532 = vxpose.xlu0.c.b16.cont [6/8] 0, 128
        %1533 = vxpose.xlu0.c.b16.cont [7/8] 0, 128
        %1534 = vxpose.xlu0.c.b16.end [8/8] 0, 128
        %v1535 = vpop.trf.xlu0
        %v1536 = vpop.trf.xlu0
        %v1537 = vpop.trf.xlu0
        %v1538 = vpop.trf.xlu0
        %v1539 = vpop.trf.xlu0
        %v1540 = vpop.trf.xlu0
        %v1541 = vpop.trf.xlu0
        %v1542 = vpop.trf.xlu0
        %vm1543 = vcmask 130048
        %v1545 = vsel %vm1543, %v1535, 0
        %1547 = vmatprep.subr.bf16.mxu0 0
        %1548 = vmatpush1.bf16.msra.mxu0 %v1526
        %1549 = vmatprep.subr.bf16.mxu0 0
        %1550 = vmatpush1.bf16.msra.mxu0 0
        %1551 = vmatprep.subr.bf16.mxu0 0
        %1552 = vmatpush1.bf16.msra.mxu0 0
        %1553 = vmatprep.subr.bf16.mxu0 0
        %1554 = vmatpush1.bf16.msra.mxu0 0
        %1555 = vmatprep.subr.bf16.mxu0 0
        %1556 = vmatpush1.bf16.msra.mxu0 0
        %1557 = vmatprep.subr.bf16.mxu0 0
        %1558 = vmatpush1.bf16.msra.mxu0 0
        %1559 = vmatprep.subr.bf16.mxu0 0
        %1560 = vmatpush1.bf16.msra.mxu0 0
        %1561 = vmatprep.subr.bf16.mxu0 0
        %1562 = vmatpush1.bf16.msra.mxu0 0
        %1563 = vmatprep.subr.bf16.mxu0 0
        %1564 = vmatpush1.bf16.msra.mxu0 0
        %1565 = vmatprep.subr.bf16.mxu0 0
        %1566 = vmatpush1.bf16.msra.mxu0 0
        %1567 = vmatprep.subr.bf16.mxu0 0
        %1568 = vmatpush1.bf16.msra.mxu0 0
        %1569 = vmatprep.subr.bf16.mxu0 0
        %1570 = vmatpush1.bf16.msra.mxu0 0
        %1571 = vmatprep.subr.bf16.mxu0 0
        %1572 = vmatpush1.bf16.msra.mxu0 0
        %1573 = vmatprep.subr.bf16.mxu0 0
        %1574 = vmatpush1.bf16.msra.mxu0 0
        %1575 = vmatprep.subr.bf16.mxu0 0
        %1576 = vmatpush1.bf16.msra.mxu0 0
        %1577 = vmatprep.subr.bf16.mxu0 0
        %1578 = vmatpush1.bf16.msra.mxu0 0
        %1579 = vmatprep.mubr.bf16.mxu0 0
        %1580 = vmatmul.mubr.bf16.gmra.mrb[0].mxu0 %v1545
        %v1581 = vpop.f32.mrb[0].mxu0
        %v1582 = vadd.f32 0.0, %v1581
        %v1583 = vpop.f32.mrb[0].mxu0
        %v1584 = vpop.f32.mrb[0].mxu0
        %v1585 = vpop.f32.mrb[0].mxu0
        %1586 = vdwg.mxu0
        %1587 = vst.msk [vmem:[%s540] sm:$0xff] %vm619, %v1582
        %s1588 = sand.u32 %s308, 1
        %s1589 = scalar_lea.sflag [#allocation4], %s1588
        %s1590 = sand.u32 %s308, 1
        %s1591 = smul.addr %s1590, 8
        %s1592 = scalar_lea.vmem [#allocation8], %s1591
        // Predicated region
        $region77: #{tpu_custom_call.1} parent=63 // pred_check
          %p1593 = pneg %p318
        $region78: #{tpu_custom_call.1} parent=63 // pred_check_branch
          %1595 = sbr.rel (%p1593) target = $region80
        $region79: #{tpu_custom_call.1} parent=63 // pred_region
          %s1597 = ssub.s32 128, 128
          %1598 = vsyncadd %s1589, %s1597
          %s1599 = smul.addr %s29, 128
          %s1600 = scalar_lea.hbm %s11, %s1599
          %s1602 = sshll.u32 %s1592, 4
          %s1603 = int_to_ptr.vmem [resolvable:$true] %s1602
          %1605 = dma.vmem_to_hbm [thread:$0]  %s1603, 128, %s1600, %s1589
        $region80: #{tpu_custom_call.1} parent=63 // pred_fallthru
          _
      $region64: #{tpu_custom_call.1} parent=5 // pred_fallthru
        _
      %p1606 = scmp.le.s32.totalorder 2, %s24
      // Predicated region
      $region81: #{tpu_custom_call.1} parent=5 // pred_check
        %p1607 = pneg %p1606
      $region82: #{tpu_custom_call.1} parent=5 // pred_check_branch
        %1609 = sbr.rel (%p1607) target = $region84
      $region83: #{tpu_custom_call.1} parent=5 // pred_region
        %s1610 = ssub.s32 %s24, 2
        // Predicated region
        $region85: #{tpu_custom_call.1} parent=83 // pred_check
          %p1611 = pneg %p324
        $region86: #{tpu_custom_call.1} parent=83 // pred_check_branch
          %1613 = sbr.rel (%p1611) target = $region88
        $region87: #{tpu_custom_call.1} parent=83 // pred_region
          %s1614 = sand.u32 %s309, 1
          %s1615 = scalar_lea.sflag [#allocation4], %s1614
          %s1616 = sand.u32 %s309, 1
          %s1617 = smul.addr %s1616, 8
          %s1618 = scalar_lea.vmem [#allocation8], %s1617
          %1619 = dma.done %s1615, 128
        $region88: #{tpu_custom_call.1} parent=83 // pred_fallthru
          _
      $region84: #{tpu_custom_call.1} parent=5 // pred_fallthru
        _
    $region6: #{tpu_custom_call.1} parent=1 // loop_footer
      %s28 = sadd.s32 1, %s24
    $region7: #{tpu_custom_call.1} parent=1 // loop_footer_branch
      %23 = sbr.rel target = $region3
    $region8: #{tpu_custom_call.1} parent=1 // loop_exit
      _
    %1620 = vsyncpa [#allocation3], 1
    %s1621 = scalar_lea.sflag [#allocation3], 1
    %1622 = vsyncpa %s1621, 1
    %1623 = vsyncpa [#allocation6], 1
    %s1624 = scalar_lea.sflag [#allocation6], 1
    %1625 = vsyncpa %s1624, 1
    %1626 = vsyncpa [#allocation4], 1
    %s1627 = scalar_lea.sflag [#allocation4], 1
    %1628 = vsyncpa %s1627, 1

</llo_original>
